<compile_context>
chip_gen: v5e
topology: v5e:2x2
jax: 0.10.0
libtpu: 0.0.40
codegen_flags: <defaults>
</compile_context>

<pallas_src>
import functools
import math

import jax
import jax.numpy as jnp
import numpy as np
from jax.experimental import pallas as pl
from jax.experimental.pallas import tpu as pltpu


def _build_dft_operators(H, W):
    """Real-valued rfft2 / irfft2 (norm='ortho') operators on the flattened
    spatial axis, built in float64 and cast to f32.  Scale, Hermitian fold and
    sign conventions are folded into the matrices.

    Returns:
      k_stack : (2*H*Wf, H*W)  stacked [Re; Im] forward operator
      a_cat   : (H*W, 2*H*Wf)  fused inverse operator [Re | -Im]
    """
    Wf = W // 2 + 1
    scale = 1.0 / np.sqrt(H * W)

    k1 = np.arange(H)[:, None]
    n1 = np.arange(H)[None, :]
    k2 = np.arange(Wf)[:, None]
    n2 = np.arange(W)[None, :]

    # Forward rfft2: X[k1*Wf+k2] = scale * sum exp(-2pi i (k1 n1/H + k2 n2/W)) x[n1*W+n2]
    fh = np.exp(-2j * np.pi * k1 * n1 / H)                    # (H, H)   [k1, n1]
    fw = np.exp(-2j * np.pi * k2 * n2 / W)                    # (Wf, W)  [k2, n2]
    F = scale * np.kron(fh, fw)                               # (H*Wf, H*W)
    k_stack = np.concatenate([F.real, F.imag], axis=0)        # (2*H*Wf, H*W)

    # Inverse irfft2 with Hermitian fold; imag parts of DC/Nyquist bins dropped
    # (matches pocketfft / torch irfft semantics).
    c = np.full((Wf,), 2.0)
    c[0] = 1.0
    if W % 2 == 0:
        c[-1] = 1.0
    gh = np.exp(+2j * np.pi * n1.T * k1.T / H)                # (H, H)   [n1, k1]
    gw = c[None, :] * np.exp(+2j * np.pi * n2.T * k2.T / W)   # (W, Wf)  [n2, k2]
    G = scale * np.kron(gh, gw)                               # (H*W, H*Wf)
    a_cat = np.concatenate([G.real, -G.imag], axis=1)         # (H*W, 2*H*Wf), sign folded

    f32 = lambda a: jnp.asarray(a, dtype=jnp.float32)
    return f32(k_stack), f32(a_cat)


def _global_filter_kernel(x_ref, w_ref, k_ref, a_ref, o_ref, *, hwf, b_blk):
    # x_ref: (b_blk, HW, c_blk)   w_ref: (2*HWf, c_blk)
    # k_ref: (2*HWf, HW)          a_ref: (HW, 2*HWf)        o_ref: (b_blk, HW, c_blk)
    k = k_ref[...]
    a = a_ref[...]
    wr = w_ref[:hwf, :]
    wi = w_ref[hwf:, :]

    # Short static unroll over the batch sub-slab: each iteration is two
    # lane-dense 2-D MXU matmuls (K = HW = 196 and K = 2*HWf = 224).
    for b in range(b_blk):
        x = x_ref[b]                                                   # (HW, c_blk) f32

        # rfft2 as one stacked real matmul: rows [0:hwf] = Re, rows [hwf:] = Im.
        spec = jnp.dot(k, x, preferred_element_type=jnp.float32)      # (2*HWf, c_blk)
        xr = spec[:hwf, :]
        xi = spec[hwf:, :]

        # Per-channel complex filter multiply (channels on the lane axis).
        yr = xr * wr - xi * wi
        yi = xr * wi + xi * wr

        # irfft2 as a single fused matmul: a_cat @ [yr; yi]  (112 is 8-aligned,
        # so the sublane concat needs no relayout).
        y = jnp.concatenate([yr, yi], axis=0)                         # (2*HWf, c_blk)
        out = jnp.dot(a, y, preferred_element_type=jnp.float32)       # (HW, c_blk)
        o_ref[b] = out.astype(o_ref.dtype)


def _pick_blocks(B, C_pad, HW):
    """Largest lane-dense channel block dividing C_pad (<=1024), then the largest
    batch block dividing B that keeps double-buffered x+out slabs comfortably
    inside VMEM on every TPU generation."""
    c_blk = 128
    for cand in (1024, 512, 256, 128):
        if C_pad % cand == 0:
            c_blk = cand
            break
    b_blk = 1
    for cand in (8, 4, 2, 1):
        # 2 (x + out) * 2 (double-buffer) * b_blk*HW*c_blk*4B  <=  ~25 MB
        if B % cand == 0 and 16 * cand * HW * c_blk <= (25 << 20):
            b_blk = cand
            break
    return b_blk, c_blk


def global_filter(x, complex_weight):
    """x: (B, H, W, C) float32;  complex_weight: (H, W//2+1, C, 2) float32."""
    B, H, W, C = x.shape
    Wf = W // 2 + 1
    assert complex_weight.shape == (H, Wf, C, 2)
    HW = H * W
    HWf = H * Wf

    k_stack, a_cat = _build_dft_operators(H, W)

    # Layout-preserving flattening of the spatial axes (no transposes).
    x_flat = x.reshape(B, HW, C)
    # Stacked [Re; Im] per-channel filter weights: (2*HWf, C).
    w_cat = jnp.concatenate(
        [complex_weight[..., 0].reshape(HWf, C),
         complex_weight[..., 1].reshape(HWf, C)], axis=0)

    # Pad channels to a multiple of 128 (lane-dense, unmasked stores).
    C_pad = C if C % 128 == 0 else ((C + 127) // 128) * 128
    if C_pad != C:
        x_flat = jnp.pad(x_flat, ((0, 0), (0, 0), (0, C_pad - C)))
        w_cat = jnp.pad(w_cat, ((0, 0), (0, C_pad - C)))

    b_blk, c_blk = _pick_blocks(B, C_pad, HW)
    assert B % b_blk == 0 and C_pad % c_blk == 0

    flops = 8 * B * C_pad * HW * HWf + 6 * B * C_pad * HWf
    bytes_accessed = 4 * (2 * B * HW * C_pad + 2 * HWf * C_pad
                          + 2 * HWf * HW + HW * 2 * HWf)

    out = pl.pallas_call(
        functools.partial(_global_filter_kernel, hwf=HWf, b_blk=b_blk),
        out_shape=jax.ShapeDtypeStruct((B, HW, C_pad), x.dtype),
        # batch axis innermost -> weight/operator blocks re-used across steps
        grid=(C_pad // c_blk, B // b_blk),
        in_specs=[
            pl.BlockSpec((b_blk, HW, c_blk), lambda ci, bi: (bi, 0, ci)),  # x slab
            pl.BlockSpec((2 * HWf, c_blk), lambda ci, bi: (0, ci)),        # [wr; wi]
            pl.BlockSpec((2 * HWf, HW), lambda ci, bi: (0, 0)),            # fwd operator
            pl.BlockSpec((HW, 2 * HWf), lambda ci, bi: (0, 0)),            # fused inverse
        ],
        out_specs=pl.BlockSpec((b_blk, HW, c_blk), lambda ci, bi: (bi, 0, ci)),
        compiler_params=pltpu.CompilerParams(
            dimension_semantics=("parallel", "parallel"),
            vmem_limit_bytes=48 << 20),
        cost_estimate=pl.CostEstimate(flops=flops, transcendentals=0,
                                      bytes_accessed=bytes_accessed),
    )(x_flat, w_cat, k_stack, a_cat)

    if C_pad != C:
        out = out[..., :C]
    return out.reshape(B, H, W, C)


if __name__ == "__main__":
    # GFNet defaults: h=14, w=8  ->  spatial H=14, W=14 (W//2+1 == 8).
    B, H, W, C = 2, 14, 14, 256
    key = jax.random.PRNGKey(0)
    kx, kw = jax.random.split(key)
    x = jax.random.normal(kx, (B, H, W, C), dtype=jnp.float32)
    # deterministic synthetic parameter, same shape/scale as torch.randn(h,w,dim,2)*0.02
    complex_weight = 0.02 * jax.random.normal(
        kw, (H, W // 2 + 1, C, 2), dtype=jnp.float32)

    out = jax.block_until_ready(global_filter(x, complex_weight))

    # reference (same semantics as torch.fft rfft2/irfft2 with norm='ortho')
    wc = complex_weight[..., 0] + 1j * complex_weight[..., 1]
    ref = jnp.fft.irfft2(
        jnp.fft.rfft2(x, axes=(1, 2), norm="ortho") * wc,
        s=(H, W), axes=(1, 2), norm="ortho").astype(jnp.float32)
    err = float(jnp.max(jnp.abs(out - ref)))
    assert out.shape == (B, H, W, C) and out.dtype == jnp.float32
    assert err < 5e-3, f"max abs err {err}"
    print("KERNEL_OK")
</pallas_src>

<mosaic_0001>
module attributes {stable_mosaic.version = 11 : i64} {
  func.func @_global_filter_kernel(%arg0: i32, %arg1: i32, %arg2: memref<2x196x256xf32, #tpu.memory_space<vmem>>, %arg3: memref<224x256xf32, #tpu.memory_space<vmem>>, %arg4: memref<224x196xf32, #tpu.memory_space<vmem>>, %arg5: memref<196x224xf32, #tpu.memory_space<vmem>>, %arg6: memref<2x196x256xf32, #tpu.memory_space<vmem>>) attributes {dimension_semantics = [#tpu.dimension_semantics<parallel>, #tpu.dimension_semantics<parallel>], iteration_bounds = array<i64: 1, 1>, scalar_prefetch = 0 : i64, scratch_operands = 0 : i64, tpu.core_type = #tpu.core_type<tc>, window_params = [{transform_indices = @transform_0, window_bounds = array<i64: 2, 196, 256>}, {transform_indices = @transform_1, window_bounds = array<i64: 224, 256>}, {pipeline_mode = #tpu.pipeline_mode<synchronous>, transform_indices = @transform_2, window_bounds = array<i64: 224, 196>}, {pipeline_mode = #tpu.pipeline_mode<synchronous>, transform_indices = @transform_3, window_bounds = array<i64: 196, 224>}, {transform_indices = @transform_4, window_bounds = array<i64: 2, 196, 256>}]} {
    %c0 = arith.constant 0 : index
    %c0_0 = arith.constant 0 : index
    %0 = vector.load %arg4[%c0, %c0_0] : memref<224x196xf32, #tpu.memory_space<vmem>>, vector<224x196xf32>
    %c0_1 = arith.constant 0 : index
    %c0_2 = arith.constant 0 : index
    %1 = vector.load %arg5[%c0_1, %c0_2] : memref<196x224xf32, #tpu.memory_space<vmem>>, vector<196x224xf32>
    %c0_3 = arith.constant 0 : index
    %c0_4 = arith.constant 0 : index
    %2 = vector.load %arg3[%c0_3, %c0_4] : memref<224x256xf32, #tpu.memory_space<vmem>>, vector<112x256xf32>
    %c112 = arith.constant 112 : index
    %c0_5 = arith.constant 0 : index
    %3 = vector.load %arg3[%c112, %c0_5] : memref<224x256xf32, #tpu.memory_space<vmem>>, vector<112x256xf32>
    %c0_6 = arith.constant 0 : index
    %c0_7 = arith.constant 0 : index
    %c0_8 = arith.constant 0 : index
    %4 = vector.load %arg2[%c0_6, %c0_7, %c0_8] : memref<2x196x256xf32, #tpu.memory_space<vmem>>, vector<1x196x256xf32>
    %5 = vector.shape_cast %4 : vector<1x196x256xf32> to vector<196x256xf32>
    %cst = arith.constant dense<0.000000e+00> : vector<224x256xf32>
    %6 = tpu.matmul %0, %5, %cst {dimension_numbers = #tpu.dot_dimension_numbers<[1], [0], [0], [1], [0, 0, 1, 1], [], []>} : vector<224x196xf32>, vector<196x256xf32>, vector<224x256xf32> -> vector<224x256xf32>
    %7 = vector.extract_strided_slice %6 {offsets = [0, 0], sizes = [112, 256], strides = [1, 1]} : vector<224x256xf32> to vector<112x256xf32>
    %8 = vector.extract_strided_slice %6 {offsets = [112, 0], sizes = [112, 256], strides = [1, 1]} : vector<224x256xf32> to vector<112x256xf32>
    %9 = arith.mulf %7, %2 : vector<112x256xf32>
    %10 = arith.mulf %8, %3 : vector<112x256xf32>
    %11 = arith.subf %9, %10 : vector<112x256xf32>
    %12 = arith.mulf %7, %3 : vector<112x256xf32>
    %13 = arith.mulf %8, %2 : vector<112x256xf32>
    %14 = arith.addf %12, %13 : vector<112x256xf32>
    %15 = tpu.concatenate %11, %14 in 0 : vector<112x256xf32>, vector<112x256xf32> -> vector<224x256xf32>
    %cst_9 = arith.constant dense<0.000000e+00> : vector<196x256xf32>
    %16 = tpu.matmul %1, %15, %cst_9 {dimension_numbers = #tpu.dot_dimension_numbers<[1], [0], [0], [1], [0, 0, 1, 1], [], []>} : vector<196x224xf32>, vector<224x256xf32>, vector<196x256xf32> -> vector<196x256xf32>
    %c0_10 = arith.constant 0 : index
    %c0_11 = arith.constant 0 : index
    %c0_12 = arith.constant 0 : index
    %17 = vector.load %arg6[%c0_10, %c0_11, %c0_12] : memref<2x196x256xf32, #tpu.memory_space<vmem>>, vector<1x196x256xf32>
    %18 = vector.shape_cast %17 : vector<1x196x256xf32> to vector<196x256xf32>
    %19 = vector.shape_cast %16 : vector<196x256xf32> to vector<1x196x256xf32>
    tpu.vector_store %arg6[%c0_10, %c0_11, %c0_12], %19 {strides = array<i32>} : memref<2x196x256xf32, #tpu.memory_space<vmem>>, vector<1x196x256xf32>,
    %c1 = arith.constant 1 : index
    %c0_13 = arith.constant 0 : index
    %c0_14 = arith.constant 0 : index
    %20 = vector.load %arg2[%c1, %c0_13, %c0_14] : memref<2x196x256xf32, #tpu.memory_space<vmem>>, vector<1x196x256xf32>
    %21 = vector.shape_cast %20 : vector<1x196x256xf32> to vector<196x256xf32>
    %cst_15 = arith.constant dense<0.000000e+00> : vector<224x256xf32>
    %22 = tpu.matmul %0, %21, %cst_15 {dimension_numbers = #tpu.dot_dimension_numbers<[1], [0], [0], [1], [0, 0, 1, 1], [], []>} : vector<224x196xf32>, vector<196x256xf32>, vector<224x256xf32> -> vector<224x256xf32>
    %23 = vector.extract_strided_slice %22 {offsets = [0, 0], sizes = [112, 256], strides = [1, 1]} : vector<224x256xf32> to vector<112x256xf32>
    %24 = vector.extract_strided_slice %22 {offsets = [112, 0], sizes = [112, 256], strides = [1, 1]} : vector<224x256xf32> to vector<112x256xf32>
    %25 = arith.mulf %23, %2 : vector<112x256xf32>
    %26 = arith.mulf %24, %3 : vector<112x256xf32>
    %27 = arith.subf %25, %26 : vector<112x256xf32>
    %28 = arith.mulf %23, %3 : vector<112x256xf32>
    %29 = arith.mulf %24, %2 : vector<112x256xf32>
    %30 = arith.addf %28, %29 : vector<112x256xf32>
    %31 = tpu.concatenate %27, %30 in 0 : vector<112x256xf32>, vector<112x256xf32> -> vector<224x256xf32>
    %cst_16 = arith.constant dense<0.000000e+00> : vector<196x256xf32>
    %32 = tpu.matmul %1, %31, %cst_16 {dimension_numbers = #tpu.dot_dimension_numbers<[1], [0], [0], [1], [0, 0, 1, 1], [], []>} : vector<196x224xf32>, vector<224x256xf32>, vector<196x256xf32> -> vector<196x256xf32>
    %c1_17 = arith.constant 1 : index
    %c0_18 = arith.constant 0 : index
    %c0_19 = arith.constant 0 : index
    %33 = vector.load %arg6[%c1_17, %c0_18, %c0_19] : memref<2x196x256xf32, #tpu.memory_space<vmem>>, vector<1x196x256xf32>
    %34 = vector.shape_cast %33 : vector<1x196x256xf32> to vector<196x256xf32>
    %35 = vector.shape_cast %32 : vector<196x256xf32> to vector<1x196x256xf32>
    tpu.vector_store %arg6[%c1_17, %c0_18, %c0_19], %35 {strides = array<i32>} : memref<2x196x256xf32, #tpu.memory_space<vmem>>, vector<1x196x256xf32>,
    return
  }
  func.func @transform_0(%arg0: i32, %arg1: i32) -> (i32, i32, i32) {
    %c0_i32 = arith.constant 0 : i32
    %c0_i32_0 = arith.constant 0 : i32
    return %arg1, %c0_i32, %arg0 : i32, i32, i32
  }
  func.func @transform_1(%arg0: i32, %arg1: i32) -> (i32, i32) {
    %c0_i32 = arith.constant 0 : i32
    %c0_i32_0 = arith.constant 0 : i32
    return %c0_i32, %arg0 : i32, i32
  }
  func.func @transform_2(%arg0: i32, %arg1: i32) -> (i32, i32) {
    %c0_i32 = arith.constant 0 : i32
    %c0_i32_0 = arith.constant 0 : i32
    %c0_i32_1 = arith.constant 0 : i32
    return %c0_i32, %c0_i32_0 : i32, i32
  }
  func.func @transform_3(%arg0: i32, %arg1: i32) -> (i32, i32) {
    %c0_i32 = arith.constant 0 : i32
    %c0_i32_0 = arith.constant 0 : i32
    %c0_i32_1 = arith.constant 0 : i32
    return %c0_i32, %c0_i32_0 : i32, i32
  }
  func.func @transform_4(%arg0: i32, %arg1: i32) -> (i32, i32, i32) {
    %c0_i32 = arith.constant 0 : i32
    %c0_i32_0 = arith.constant 0 : i32
    return %arg1, %c0_i32, %arg0 : i32, i32, i32
  }
}

</mosaic_0001>

<llo_original>
// kernel: tpu_custom_call.1
$region0: #{tpu_custom_call.1}
  #allocation0 [shape = 'u32[]', space=smem, size = 0x4, offset = 0x4, fixed_abs, tag = 'smem constant byte address 0x4 - core index']
  #allocation1 [shape = 'u32[72,128]{1,0:T(1,128)}', space=vmem, size = 0x9000, scoped, tag = 'internal scratch']
  %s0 = inlined_call_operand.vmem [shape: f32[2,196,256], index: 0, kind: input, shape index: {}]
  %s1 = inlined_call_operand.vmem [shape: f32[224,256], index: 1, kind: input, shape index: {}]
  %s2 = inlined_call_operand.vmem [shape: f32[224,196], index: 2, kind: input, shape index: {}]
  %s3 = inlined_call_operand.vmem [shape: f32[196,224], index: 3, kind: input, shape index: {}]
  %s4 = inlined_call_operand.vmem [shape: f32[2,196,256], index: 4, kind: output, shape index: {}]
  %s5 = sld [smem:[#allocation0]]
  $region26: #{tpu_custom_call.1} parent=0
    _
  %s7 = ssub.s32 1, %s5
  %s8 = scalar_select 0, %s7, %s5
  // Predicated region
  $region2: #{tpu_custom_call.1} parent=0 // pred_check
    _
  $region3: #{tpu_custom_call.1} parent=0 // pred_check_branch
    %10 = sbr.rel (0) target = $region5
  $region4: #{tpu_custom_call.1} parent=0 // pred_region
    _
  $region5: #{tpu_custom_call.1} parent=0 // pred_fallthru
    _
  // Predicated region
  $region6: #{tpu_custom_call.1} parent=0 // pred_check
    _
  $region7: #{tpu_custom_call.1} parent=0 // pred_check_branch
    %12 = sbr.rel (0) target = $region9
  $region8: #{tpu_custom_call.1} parent=0 // pred_region
    _
  $region9: #{tpu_custom_call.1} parent=0 // pred_fallthru
    _
  // Predicated region
  $region10: #{tpu_custom_call.1} parent=0 // pred_check
    _
  $region11: #{tpu_custom_call.1} parent=0 // pred_check_branch
    %14 = sbr.rel (0) target = $region13
  $region12: #{tpu_custom_call.1} parent=0 // pred_region
    _
  $region13: #{tpu_custom_call.1} parent=0 // pred_fallthru
    _
  // Predicated region
  $region14: #{tpu_custom_call.1} parent=0 // pred_check
    _
  $region15: #{tpu_custom_call.1} parent=0 // pred_check_branch
    %16 = sbr.rel (0) target = $region17
  $region16: #{tpu_custom_call.1} parent=0 // pred_region
    _
  $region17: #{tpu_custom_call.1} parent=0 // pred_fallthru
    _
  %v17 = vld [vmem:[%s2] sm:$0xff]
  %v18 = vld [vmem:[%s2 + $0x8] sm:$0xff]
  %v19 = vld [vmem:[%s2 + $0x10] sm:$0xff]
  %v20 = vld [vmem:[%s2 + $0x18] sm:$0xff]
  %v21 = vld [vmem:[%s2 + $0x20] sm:$0xff]
  %v22 = vld [vmem:[%s2 + $0x28] sm:$0xff]
  %v23 = vld [vmem:[%s2 + $0x30] sm:$0xff]
  %v24 = vld [vmem:[%s2 + $0x38] sm:$0xff]
  %v25 = vld [vmem:[%s2 + $0x40] sm:$0xff]
  %v26 = vld [vmem:[%s2 + $0x48] sm:$0xff]
  %v27 = vld [vmem:[%s2 + $0x50] sm:$0xff]
  %v28 = vld [vmem:[%s2 + $0x58] sm:$0xff]
  %v29 = vld [vmem:[%s2 + $0x60] sm:$0xff]
  %v30 = vld [vmem:[%s2 + $0x68] sm:$0xff]
  %v31 = vld [vmem:[%s2 + $0x70] sm:$0xff]
  %v32 = vld [vmem:[%s2 + $0x78] sm:$0xff]
  %v33 = vld [vmem:[%s2 + $0x80] sm:$0xff]
  %v34 = vld [vmem:[%s2 + $0x88] sm:$0xff]
  %v35 = vld [vmem:[%s2 + $0x90] sm:$0xff]
  %v36 = vld [vmem:[%s2 + $0x98] sm:$0xff]
  %v37 = vld [vmem:[%s2 + $0xa0] sm:$0xff]
  %v38 = vld [vmem:[%s2 + $0xa8] sm:$0xff]
  %v39 = vld [vmem:[%s2 + $0xb0] sm:$0xff]
  %v40 = vld [vmem:[%s2 + $0xb8] sm:$0xff]
  %v41 = vld [vmem:[%s2 + $0xc0] sm:$0xff]
  %v42 = vld [vmem:[%s2 + $0xc8] sm:$0xff]
  %v43 = vld [vmem:[%s2 + $0xd0] sm:$0xff]
  %v44 = vld [vmem:[%s2 + $0xd8] sm:$0xff]
  %v45 = vld [vmem:[%s2 + $0xe0] sm:$0xff]
  %v46 = vld [vmem:[%s2 + $0xe8] sm:$0xff]
  %v47 = vld [vmem:[%s2 + $0xf0] sm:$0xff]
  %v48 = vld [vmem:[%s2 + $0xf8] sm:$0xff]
  %v49 = vld [vmem:[%s2 + $0x100] sm:$0xff]
  %v50 = vld [vmem:[%s2 + $0x108] sm:$0xff]
  %v51 = vld [vmem:[%s2 + $0x110] sm:$0xff]
  %v52 = vld [vmem:[%s2 + $0x118] sm:$0xff]
  %v53 = vld [vmem:[%s2 + $0x120] sm:$0xff]
  %v54 = vld [vmem:[%s2 + $0x128] sm:$0xff]
  %v55 = vld [vmem:[%s2 + $0x130] sm:$0xff]
  %v56 = vld [vmem:[%s2 + $0x138] sm:$0xff]
  %v57 = vld [vmem:[%s2 + $0x140] sm:$0xff]
  %v58 = vld [vmem:[%s2 + $0x148] sm:$0xff]
  %v59 = vld [vmem:[%s2 + $0x150] sm:$0xff]
  %v60 = vld [vmem:[%s2 + $0x158] sm:$0xff]
  %v61 = vld [vmem:[%s2 + $0x160] sm:$0xff]
  %v62 = vld [vmem:[%s2 + $0x168] sm:$0xff]
  %v63 = vld [vmem:[%s2 + $0x170] sm:$0xff]
  %v64 = vld [vmem:[%s2 + $0x178] sm:$0xff]
  %v65 = vld [vmem:[%s2 + $0x180] sm:$0xff]
  %v66 = vld [vmem:[%s2 + $0x188] sm:$0xff]
  %v67 = vld [vmem:[%s2 + $0x190] sm:$0xff]
  %v68 = vld [vmem:[%s2 + $0x198] sm:$0xff]
  %v69 = vld [vmem:[%s2 + $0x1a0] sm:$0xff]
  %v70 = vld [vmem:[%s2 + $0x1a8] sm:$0xff]
  %v71 = vld [vmem:[%s2 + $0x1b0] sm:$0xff]
  %v72 = vld [vmem:[%s2 + $0x1b8] sm:$0xff]
  %v73 = vld [vmem:[%s3] sm:$0xff]
  %v74 = vld [vmem:[%s3 + $0x8] sm:$0xff]
  %v75 = vld [vmem:[%s3 + $0x10] sm:$0xff]
  %v76 = vld [vmem:[%s3 + $0x18] sm:$0xff]
  %v77 = vld [vmem:[%s3 + $0x20] sm:$0xff]
  %v78 = vld [vmem:[%s3 + $0x28] sm:$0xff]
  %v79 = vld [vmem:[%s3 + $0x30] sm:$0xff]
  %v80 = vld [vmem:[%s3 + $0x38] sm:$0xff]
  %v81 = vld [vmem:[%s3 + $0x40] sm:$0xff]
  %v82 = vld [vmem:[%s3 + $0x48] sm:$0xff]
  %v83 = vld [vmem:[%s3 + $0x50] sm:$0xff]
  %v84 = vld [vmem:[%s3 + $0x58] sm:$0xff]
  %v85 = vld [vmem:[%s3 + $0x60] sm:$0xff]
  %v86 = vld [vmem:[%s3 + $0x68] sm:$0xff]
  %v87 = vld [vmem:[%s3 + $0x70] sm:$0xff]
  %v88 = vld [vmem:[%s3 + $0x78] sm:$0xff]
  %v89 = vld [vmem:[%s3 + $0x80] sm:$0xff]
  %v90 = vld [vmem:[%s3 + $0x88] sm:$0xff]
  %v91 = vld [vmem:[%s3 + $0x90] sm:$0xff]
  %v92 = vld [vmem:[%s3 + $0x98] sm:$0xff]
  %v93 = vld [vmem:[%s3 + $0xa0] sm:$0xff]
  %v94 = vld [vmem:[%s3 + $0xa8] sm:$0xff]
  %v95 = vld [vmem:[%s3 + $0xb0] sm:$0xff]
  %v96 = vld [vmem:[%s3 + $0xb8] sm:$0xff]
  %v97 = vld [vmem:[%s3 + $0xc0] sm:$0xff]
  %v98 = vld [vmem:[%s3 + $0xc8] sm:$0xff]
  %v99 = vld [vmem:[%s3 + $0xd0] sm:$0xff]
  %v100 = vld [vmem:[%s3 + $0xd8] sm:$0xff]
  %v101 = vld [vmem:[%s3 + $0xe0] sm:$0xff]
  %v102 = vld [vmem:[%s3 + $0xe8] sm:$0xff]
  %v103 = vld [vmem:[%s3 + $0xf0] sm:$0xff]
  %v104 = vld [vmem:[%s3 + $0xf8] sm:$0xff]
  %v105 = vld [vmem:[%s3 + $0x100] sm:$0xff]
  %v106 = vld [vmem:[%s3 + $0x108] sm:$0xff]
  %v107 = vld [vmem:[%s3 + $0x110] sm:$0xff]
  %v108 = vld [vmem:[%s3 + $0x118] sm:$0xff]
  %v109 = vld [vmem:[%s3 + $0x120] sm:$0xff]
  %v110 = vld [vmem:[%s3 + $0x128] sm:$0xff]
  %v111 = vld [vmem:[%s3 + $0x130] sm:$0xff]
  %v112 = vld [vmem:[%s3 + $0x138] sm:$0xff]
  %v113 = vld [vmem:[%s3 + $0x140] sm:$0xff]
  %v114 = vld [vmem:[%s3 + $0x148] sm:$0xff]
  %v115 = vld [vmem:[%s3 + $0x150] sm:$0xff]
  %v116 = vld [vmem:[%s3 + $0x158] sm:$0xff]
  %v117 = vld [vmem:[%s3 + $0x160] sm:$0xff]
  %v118 = vld [vmem:[%s3 + $0x168] sm:$0xff]
  %v119 = vld [vmem:[%s3 + $0x170] sm:$0xff]
  %v120 = vld [vmem:[%s3 + $0x178] sm:$0xff]
  %v121 = vld [vmem:[%s3 + $0x180] sm:$0xf]
  %v122 = vld [vmem:[%s3 + $0x188] sm:$0xf]
  %v123 = vld [vmem:[%s1] sm:$0xff]
  %v124 = vld [vmem:[%s1 + $0x8] sm:$0xff]
  %v125 = vld [vmem:[%s1 + $0x10] sm:$0xff]
  %v126 = vld [vmem:[%s1 + $0x18] sm:$0xff]
  %v127 = vld [vmem:[%s1 + $0x20] sm:$0xff]
  %v128 = vld [vmem:[%s1 + $0x28] sm:$0xff]
  %v129 = vld [vmem:[%s1 + $0x30] sm:$0xff]
  %v130 = vld [vmem:[%s1 + $0x38] sm:$0xff]
  %v131 = vld [vmem:[%s1 + $0x40] sm:$0xff]
  %v132 = vld [vmem:[%s1 + $0x48] sm:$0xff]
  %v133 = vld [vmem:[%s1 + $0x50] sm:$0xff]
  %v134 = vld [vmem:[%s1 + $0x58] sm:$0xff]
  %v135 = vld [vmem:[%s1 + $0x60] sm:$0xff]
  %v136 = vld [vmem:[%s1 + $0x68] sm:$0xff]
  %v137 = vld [vmem:[%s1 + $0x70] sm:$0xff]
  %v138 = vld [vmem:[%s1 + $0x78] sm:$0xff]
  %v139 = vld [vmem:[%s1 + $0x80] sm:$0xff]
  %v140 = vld [vmem:[%s1 + $0x88] sm:$0xff]
  %v141 = vld [vmem:[%s1 + $0x90] sm:$0xff]
  %v142 = vld [vmem:[%s1 + $0x98] sm:$0xff]
  %v143 = vld [vmem:[%s1 + $0xa0] sm:$0xff]
  %v144 = vld [vmem:[%s1 + $0xa8] sm:$0xff]
  %v145 = vld [vmem:[%s1 + $0xb0] sm:$0xff]
  %v146 = vld [vmem:[%s1 + $0xb8] sm:$0xff]
  %v147 = vld [vmem:[%s1 + $0xc0] sm:$0xff]
  %v148 = vld [vmem:[%s1 + $0xc8] sm:$0xff]
  %v149 = vld [vmem:[%s1 + $0xd0] sm:$0xff]
  %v150 = vld [vmem:[%s1 + $0xd8] sm:$0xff]
  %v151 = vld [vmem:[%s1 + $0xe0] sm:$0xff]
  %v152 = vld [vmem:[%s1 + $0xe8] sm:$0xff]
  %v153 = vld [vmem:[%s1 + $0xf0] sm:$0xff]
  %v154 = vld [vmem:[%s1 + $0xf8] sm:$0xff]
  %v155 = vld [vmem:[%s1 + $0x100] sm:$0xff]
  %v156 = vld [vmem:[%s1 + $0x108] sm:$0xff]
  %v157 = vld [vmem:[%s1 + $0x110] sm:$0xff]
  %v158 = vld [vmem:[%s1 + $0x118] sm:$0xff]
  %v159 = vld [vmem:[%s1 + $0x120] sm:$0xff]
  %v160 = vld [vmem:[%s1 + $0x128] sm:$0xff]
  %v161 = vld [vmem:[%s1 + $0x130] sm:$0xff]
  %v162 = vld [vmem:[%s1 + $0x138] sm:$0xff]
  %v163 = vld [vmem:[%s1 + $0x140] sm:$0xff]
  %v164 = vld [vmem:[%s1 + $0x148] sm:$0xff]
  %v165 = vld [vmem:[%s1 + $0x150] sm:$0xff]
  %v166 = vld [vmem:[%s1 + $0x158] sm:$0xff]
  %v167 = vld [vmem:[%s1 + $0x160] sm:$0xff]
  %v168 = vld [vmem:[%s1 + $0x168] sm:$0xff]
  %v169 = vld [vmem:[%s1 + $0x170] sm:$0xff]
  %v170 = vld [vmem:[%s1 + $0x178] sm:$0xff]
  %v171 = vld [vmem:[%s1 + $0x180] sm:$0xff]
  %v172 = vld [vmem:[%s1 + $0x188] sm:$0xff]
  %v173 = vld [vmem:[%s1 + $0x190] sm:$0xff]
  %v174 = vld [vmem:[%s1 + $0x198] sm:$0xff]
  %v175 = vld [vmem:[%s1 + $0x1a0] sm:$0xff]
  %v176 = vld [vmem:[%s1 + $0x1a8] sm:$0xff]
  %v177 = vld [vmem:[%s1 + $0x1b0] sm:$0xff]
  %v178 = vld [vmem:[%s1 + $0x1b8] sm:$0xff]
  %v179 = vld [vmem:[%s0] sm:$0xff]
  %v180 = vld [vmem:[%s0 + $0x8] sm:$0xff]
  %v181 = vld [vmem:[%s0 + $0x10] sm:$0xff]
  %v182 = vld [vmem:[%s0 + $0x18] sm:$0xff]
  %v183 = vld [vmem:[%s0 + $0x20] sm:$0xff]
  %v184 = vld [vmem:[%s0 + $0x28] sm:$0xff]
  %v185 = vld [vmem:[%s0 + $0x30] sm:$0xff]
  %v186 = vld [vmem:[%s0 + $0x38] sm:$0xff]
  %v187 = vld [vmem:[%s0 + $0x40] sm:$0xff]
  %v188 = vld [vmem:[%s0 + $0x48] sm:$0xff]
  %v189 = vld [vmem:[%s0 + $0x50] sm:$0xff]
  %v190 = vld [vmem:[%s0 + $0x58] sm:$0xff]
  %v191 = vld [vmem:[%s0 + $0x60] sm:$0xff]
  %v192 = vld [vmem:[%s0 + $0x68] sm:$0xff]
  %v193 = vld [vmem:[%s0 + $0x70] sm:$0xff]
  %v194 = vld [vmem:[%s0 + $0x78] sm:$0xff]
  %v195 = vld [vmem:[%s0 + $0x80] sm:$0xff]
  %v196 = vld [vmem:[%s0 + $0x88] sm:$0xff]
  %v197 = vld [vmem:[%s0 + $0x90] sm:$0xff]
  %v198 = vld [vmem:[%s0 + $0x98] sm:$0xff]
  %v199 = vld [vmem:[%s0 + $0xa0] sm:$0xff]
  %v200 = vld [vmem:[%s0 + $0xa8] sm:$0xff]
  %v201 = vld [vmem:[%s0 + $0xb0] sm:$0xff]
  %v202 = vld [vmem:[%s0 + $0xb8] sm:$0xff]
  %v203 = vld [vmem:[%s0 + $0xc0] sm:$0xff]
  %v204 = vld [vmem:[%s0 + $0xc8] sm:$0xff]
  %v205 = vld [vmem:[%s0 + $0xd0] sm:$0xff]
  %v206 = vld [vmem:[%s0 + $0xd8] sm:$0xff]
  %v207 = vld [vmem:[%s0 + $0xe0] sm:$0xff]
  %v208 = vld [vmem:[%s0 + $0xe8] sm:$0xff]
  %v209 = vld [vmem:[%s0 + $0xf0] sm:$0xff]
  %v210 = vld [vmem:[%s0 + $0xf8] sm:$0xff]
  %v211 = vld [vmem:[%s0 + $0x100] sm:$0xff]
  %v212 = vld [vmem:[%s0 + $0x108] sm:$0xff]
  %v213 = vld [vmem:[%s0 + $0x110] sm:$0xff]
  %v214 = vld [vmem:[%s0 + $0x118] sm:$0xff]
  %v215 = vld [vmem:[%s0 + $0x120] sm:$0xff]
  %v216 = vld [vmem:[%s0 + $0x128] sm:$0xff]
  %v217 = vld [vmem:[%s0 + $0x130] sm:$0xff]
  %v218 = vld [vmem:[%s0 + $0x138] sm:$0xff]
  %v219 = vld [vmem:[%s0 + $0x140] sm:$0xff]
  %v220 = vld [vmem:[%s0 + $0x148] sm:$0xff]
  %v221 = vld [vmem:[%s0 + $0x150] sm:$0xff]
  %v222 = vld [vmem:[%s0 + $0x158] sm:$0xff]
  %v223 = vld [vmem:[%s0 + $0x160] sm:$0xff]
  %v224 = vld [vmem:[%s0 + $0x168] sm:$0xff]
  %v225 = vld [vmem:[%s0 + $0x170] sm:$0xff]
  %v226 = vld [vmem:[%s0 + $0x178] sm:$0xff]
  %v227 = vld [vmem:[%s0 + $0x180] sm:$0xf]
  %v228 = vld [vmem:[%s0 + $0x188] sm:$0xf]
  %vm229 = vcmask 556032
  %v231 = vsel %vm229, %v18, 0
  %v234 = vsel %vm229, %v20, 0
  %v237 = vsel %vm229, %v22, 0
  %v240 = vsel %vm229, %v24, 0
  %v243 = vsel %vm229, %v26, 0
  %v246 = vsel %vm229, %v28, 0
  %v249 = vsel %vm229, %v30, 0
  %v252 = vsel %vm229, %v32, 0
  %v255 = vsel %vm229, %v34, 0
  %v258 = vsel %vm229, %v36, 0
  %v261 = vsel %vm229, %v38, 0
  %v264 = vsel %vm229, %v40, 0
  %v267 = vsel %vm229, %v42, 0
  %v270 = vsel %vm229, %v44, 0
  %v273 = vsel %vm229, %v46, 0
  %v276 = vsel %vm229, %v48, 0
  %v279 = vsel %vm229, %v50, 0
  %v282 = vsel %vm229, %v52, 0
  %v285 = vsel %vm229, %v54, 0
  %v288 = vsel %vm229, %v56, 0
  %v291 = vsel %vm229, %v58, 0
  %v294 = vsel %vm229, %v60, 0
  %v297 = vsel %vm229, %v62, 0
  %v300 = vsel %vm229, %v64, 0
  %v303 = vsel %vm229, %v66, 0
  %v306 = vsel %vm229, %v68, 0
  %v309 = vsel %vm229, %v70, 0
  %v312 = vsel %vm229, %v72, 0
  %vm314 = vcmask 1043456
  %v316 = vsel %vm314, %v227, 0
  %v319 = vsel %vm314, %v228, 0
  %321 = vmatpush.msra.mxu0 %v209
  %322 = vmatpush.msra.mxu0 %v207
  %323 = vmatpush.msra.mxu0 %v205
  %324 = vmatpush.msra.mxu0 %v203
  %325 = vmatpush.msra.mxu0 %v201
  %326 = vmatpush.msra.mxu0 %v199
  %327 = vmatpush.msra.mxu0 %v197
  %328 = vmatpush.msra.mxu0 %v195
  %329 = vmatpush.msra.mxu0 %v193
  %330 = vmatpush.msra.mxu0 %v191
  %331 = vmatpush.msra.mxu0 %v189
  %332 = vmatpush.msra.mxu0 %v187
  %333 = vmatpush.msra.mxu0 %v185
  %334 = vmatpush.msra.mxu0 %v183
  %335 = vmatpush.msra.mxu0 %v181
  %336 = vmatpush.msra.mxu0 %v179
  %337 = vmatmul.f32.gmra.mxu0 %v17
  %v338 = vpop.f32.mrf.mxu0
  %v339 = vadd.f32 0.0, %v338
  %340 = vmatmul.f32.gmra.mxu0 %v19
  %v341 = vpop.f32.mrf.mxu0
  %v342 = vadd.f32 0.0, %v341
  %343 = vmatmul.f32.gmra.mxu0 %v21
  %v344 = vpop.f32.mrf.mxu0
  %v345 = vadd.f32 0.0, %v344
  %346 = vmatmul.f32.gmra.mxu0 %v23
  %v347 = vpop.f32.mrf.mxu0
  %v348 = vadd.f32 0.0, %v347
  %349 = vmatmul.f32.gmra.mxu0 %v25
  %v350 = vpop.f32.mrf.mxu0
  %v351 = vadd.f32 0.0, %v350
  %352 = vmatmul.f32.gmra.mxu0 %v27
  %v353 = vpop.f32.mrf.mxu0
  %v354 = vadd.f32 0.0, %v353
  %355 = vmatmul.f32.gmra.mxu0 %v29
  %v356 = vpop.f32.mrf.mxu0
  %v357 = vadd.f32 0.0, %v356
  %358 = vmatmul.f32.gmra.mxu0 %v31
  %v359 = vpop.f32.mrf.mxu0
  %v360 = vadd.f32 0.0, %v359
  %361 = vmatmul.f32.gmra.mxu0 %v33
  %v362 = vpop.f32.mrf.mxu0
  %v363 = vadd.f32 0.0, %v362
  %364 = vmatmul.f32.gmra.mxu0 %v35
  %v365 = vpop.f32.mrf.mxu0
  %v366 = vadd.f32 0.0, %v365
  %367 = vmatmul.f32.gmra.mxu0 %v37
  %v368 = vpop.f32.mrf.mxu0
  %v369 = vadd.f32 0.0, %v368
  %370 = vmatmul.f32.gmra.mxu0 %v39
  %v371 = vpop.f32.mrf.mxu0
  %v372 = vadd.f32 0.0, %v371
  %373 = vmatmul.f32.gmra.mxu0 %v41
  %v374 = vpop.f32.mrf.mxu0
  %v375 = vadd.f32 0.0, %v374
  %376 = vmatmul.f32.gmra.mxu0 %v43
  %v377 = vpop.f32.mrf.mxu0
  %v378 = vadd.f32 0.0, %v377
  %379 = vmatmul.f32.gmra.mxu0 %v45
  %v380 = vpop.f32.mrf.mxu0
  %v381 = vadd.f32 0.0, %v380
  %382 = vmatmul.f32.gmra.mxu0 %v47
  %v383 = vpop.f32.mrf.mxu0
  %v384 = vadd.f32 0.0, %v383
  %385 = vmatmul.f32.gmra.mxu0 %v49
  %v386 = vpop.f32.mrf.mxu0
  %v387 = vadd.f32 0.0, %v386
  %388 = vmatmul.f32.gmra.mxu0 %v51
  %v389 = vpop.f32.mrf.mxu0
  %v390 = vadd.f32 0.0, %v389
  %391 = vmatmul.f32.gmra.mxu0 %v53
  %v392 = vpop.f32.mrf.mxu0
  %v393 = vadd.f32 0.0, %v392
  %394 = vmatmul.f32.gmra.mxu0 %v55
  %v395 = vpop.f32.mrf.mxu0
  %v396 = vadd.f32 0.0, %v395
  %397 = vmatmul.f32.gmra.mxu0 %v57
  %v398 = vpop.f32.mrf.mxu0
  %v399 = vadd.f32 0.0, %v398
  %400 = vmatmul.f32.gmra.mxu0 %v59
  %v401 = vpop.f32.mrf.mxu0
  %v402 = vadd.f32 0.0, %v401
  %403 = vmatmul.f32.gmra.mxu0 %v61
  %v404 = vpop.f32.mrf.mxu0
  %v405 = vadd.f32 0.0, %v404
  %406 = vmatmul.f32.gmra.mxu0 %v63
  %v407 = vpop.f32.mrf.mxu0
  %v408 = vadd.f32 0.0, %v407
  %409 = vmatmul.f32.gmra.mxu0 %v65
  %v410 = vpop.f32.mrf.mxu0
  %v411 = vadd.f32 0.0, %v410
  %412 = vmatmul.f32.gmra.mxu0 %v67
  %v413 = vpop.f32.mrf.mxu0
  %v414 = vadd.f32 0.0, %v413
  %415 = vmatmul.f32.gmra.mxu0 %v69
  %v416 = vpop.f32.mrf.mxu0
  %v417 = vadd.f32 0.0, %v416
  %418 = vmatmul.f32.gmra.mxu0 %v71
  %v419 = vpop.f32.mrf.mxu0
  %v420 = vadd.f32 0.0, %v419
  %421 = vdwg.mxu0
  %422 = vmatpush.msra.mxu0 0.0
  %423 = vmatpush.msra.mxu0 0.0
  %424 = vmatpush.msra.mxu0 0.0
  %425 = vmatpush.msra.mxu0 0.0
  %426 = vmatpush.msra.mxu0 0.0
  %427 = vmatpush.msra.mxu0 0.0
  %428 = vmatpush.msra.mxu0 0.0
  %429 = vmatpush.msra.mxu0 %v316
  %430 = vmatpush.msra.mxu0 %v225
  %431 = vmatpush.msra.mxu0 %v223
  %432 = vmatpush.msra.mxu0 %v221
  %433 = vmatpush.msra.mxu0 %v219
  %434 = vmatpush.msra.mxu0 %v217
  %435 = vmatpush.msra.mxu0 %v215
  %436 = vmatpush.msra.mxu0 %v213
  %437 = vmatpush.msra.mxu0 %v211
  %438 = vmatmul.f32.gmra.mxu0 %v231
  %v439 = vpop.f32.mrf.mxu0
  %v440 = vadd.f32 %v339, %v439
  %441 = vmatmul.f32.gmra.mxu0 %v234
  %v442 = vpop.f32.mrf.mxu0
  %v443 = vadd.f32 %v342, %v442
  %444 = vmatmul.f32.gmra.mxu0 %v237
  %v445 = vpop.f32.mrf.mxu0
  %v446 = vadd.f32 %v345, %v445
  %447 = vmatmul.f32.gmra.mxu0 %v240
  %v448 = vpop.f32.mrf.mxu0
  %v449 = vadd.f32 %v348, %v448
  %450 = vmatmul.f32.gmra.mxu0 %v243
  %v451 = vpop.f32.mrf.mxu0
  %v452 = vadd.f32 %v351, %v451
  %453 = vmatmul.f32.gmra.mxu0 %v246
  %v454 = vpop.f32.mrf.mxu0
  %v455 = vadd.f32 %v354, %v454
  %456 = vmatmul.f32.gmra.mxu0 %v249
  %v457 = vpop.f32.mrf.mxu0
  %v458 = vadd.f32 %v357, %v457
  %459 = vmatmul.f32.gmra.mxu0 %v252
  %v460 = vpop.f32.mrf.mxu0
  %v461 = vadd.f32 %v360, %v460
  %462 = vmatmul.f32.gmra.mxu0 %v255
  %v463 = vpop.f32.mrf.mxu0
  %v464 = vadd.f32 %v363, %v463
  %465 = vmatmul.f32.gmra.mxu0 %v258
  %v466 = vpop.f32.mrf.mxu0
  %v467 = vadd.f32 %v366, %v466
  %468 = vmatmul.f32.gmra.mxu0 %v261
  %v469 = vpop.f32.mrf.mxu0
  %v470 = vadd.f32 %v369, %v469
  %471 = vmatmul.f32.gmra.mxu0 %v264
  %v472 = vpop.f32.mrf.mxu0
  %v473 = vadd.f32 %v372, %v472
  %474 = vmatmul.f32.gmra.mxu0 %v267
  %v475 = vpop.f32.mrf.mxu0
  %v476 = vadd.f32 %v375, %v475
  %477 = vmatmul.f32.gmra.mxu0 %v270
  %v478 = vpop.f32.mrf.mxu0
  %v479 = vadd.f32 %v378, %v478
  %480 = vmatmul.f32.gmra.mxu0 %v273
  %v481 = vpop.f32.mrf.mxu0
  %v482 = vadd.f32 %v381, %v481
  %483 = vmatmul.f32.gmra.mxu0 %v276
  %v484 = vpop.f32.mrf.mxu0
  %v485 = vadd.f32 %v384, %v484
  %486 = vmatmul.f32.gmra.mxu0 %v279
  %v487 = vpop.f32.mrf.mxu0
  %v488 = vadd.f32 %v387, %v487
  %489 = vmatmul.f32.gmra.mxu0 %v282
  %v490 = vpop.f32.mrf.mxu0
  %v491 = vadd.f32 %v390, %v490
  %492 = vmatmul.f32.gmra.mxu0 %v285
  %v493 = vpop.f32.mrf.mxu0
  %v494 = vadd.f32 %v393, %v493
  %495 = vmatmul.f32.gmra.mxu0 %v288
  %v496 = vpop.f32.mrf.mxu0
  %v497 = vadd.f32 %v396, %v496
  %498 = vmatmul.f32.gmra.mxu0 %v291
  %v499 = vpop.f32.mrf.mxu0
  %v500 = vadd.f32 %v399, %v499
  %501 = vmatmul.f32.gmra.mxu0 %v294
  %v502 = vpop.f32.mrf.mxu0
  %v503 = vadd.f32 %v402, %v502
  %504 = vmatmul.f32.gmra.mxu0 %v297
  %v505 = vpop.f32.mrf.mxu0
  %v506 = vadd.f32 %v405, %v505
  %507 = vmatmul.f32.gmra.mxu0 %v300
  %v508 = vpop.f32.mrf.mxu0
  %v509 = vadd.f32 %v408, %v508
  %510 = vmatmul.f32.gmra.mxu0 %v303
  %v511 = vpop.f32.mrf.mxu0
  %v512 = vadd.f32 %v411, %v511
  %513 = vmatmul.f32.gmra.mxu0 %v306
  %v514 = vpop.f32.mrf.mxu0
  %v515 = vadd.f32 %v414, %v514
  %516 = vmatmul.f32.gmra.mxu0 %v309
  %v517 = vpop.f32.mrf.mxu0
  %v518 = vadd.f32 %v417, %v517
  %519 = vmatmul.f32.gmra.mxu0 %v312
  %v520 = vpop.f32.mrf.mxu0
  %v521 = vadd.f32 %v420, %v520
  %522 = vdwg.mxu0
  %523 = vmatpush.msra.mxu0 %v210
  %524 = vmatpush.msra.mxu0 %v208
  %525 = vmatpush.msra.mxu0 %v206
  %526 = vmatpush.msra.mxu0 %v204
  %527 = vmatpush.msra.mxu0 %v202
  %528 = vmatpush.msra.mxu0 %v200
  %529 = vmatpush.msra.mxu0 %v198
  %530 = vmatpush.msra.mxu0 %v196
  %531 = vmatpush.msra.mxu0 %v194
  %532 = vmatpush.msra.mxu0 %v192
  %533 = vmatpush.msra.mxu0 %v190
  %534 = vmatpush.msra.mxu0 %v188
  %535 = vmatpush.msra.mxu0 %v186
  %536 = vmatpush.msra.mxu0 %v184
  %537 = vmatpush.msra.mxu0 %v182
  %538 = vmatpush.msra.mxu0 %v180
  %539 = vmatmul.f32.gmra.mxu0 %v17
  %v540 = vpop.f32.mrf.mxu0
  %v541 = vadd.f32 0.0, %v540
  %542 = vmatmul.f32.gmra.mxu0 %v19
  %v543 = vpop.f32.mrf.mxu0
  %v544 = vadd.f32 0.0, %v543
  %545 = vmatmul.f32.gmra.mxu0 %v21
  %v546 = vpop.f32.mrf.mxu0
  %v547 = vadd.f32 0.0, %v546
  %548 = vmatmul.f32.gmra.mxu0 %v23
  %v549 = vpop.f32.mrf.mxu0
  %v550 = vadd.f32 0.0, %v549
  %551 = vmatmul.f32.gmra.mxu0 %v25
  %v552 = vpop.f32.mrf.mxu0
  %v553 = vadd.f32 0.0, %v552
  %554 = vmatmul.f32.gmra.mxu0 %v27
  %v555 = vpop.f32.mrf.mxu0
  %v556 = vadd.f32 0.0, %v555
  %557 = vmatmul.f32.gmra.mxu0 %v29
  %v558 = vpop.f32.mrf.mxu0
  %v559 = vadd.f32 0.0, %v558
  %560 = vmatmul.f32.gmra.mxu0 %v31
  %v561 = vpop.f32.mrf.mxu0
  %v562 = vadd.f32 0.0, %v561
  %563 = vmatmul.f32.gmra.mxu0 %v33
  %v564 = vpop.f32.mrf.mxu0
  %v565 = vadd.f32 0.0, %v564
  %566 = vmatmul.f32.gmra.mxu0 %v35
  %v567 = vpop.f32.mrf.mxu0
  %v568 = vadd.f32 0.0, %v567
  %569 = vmatmul.f32.gmra.mxu0 %v37
  %v570 = vpop.f32.mrf.mxu0
  %v571 = vadd.f32 0.0, %v570
  %572 = vmatmul.f32.gmra.mxu0 %v39
  %v573 = vpop.f32.mrf.mxu0
  %v574 = vadd.f32 0.0, %v573
  %575 = vmatmul.f32.gmra.mxu0 %v41
  %v576 = vpop.f32.mrf.mxu0
  %v577 = vadd.f32 0.0, %v576
  %578 = vmatmul.f32.gmra.mxu0 %v43
  %v579 = vpop.f32.mrf.mxu0
  %v580 = vadd.f32 0.0, %v579
  %581 = vmatmul.f32.gmra.mxu0 %v45
  %v582 = vpop.f32.mrf.mxu0
  %v583 = vadd.f32 0.0, %v582
  %584 = vmatmul.f32.gmra.mxu0 %v47
  %v585 = vpop.f32.mrf.mxu0
  %v586 = vadd.f32 0.0, %v585
  %587 = vmatmul.f32.gmra.mxu0 %v49
  %v588 = vpop.f32.mrf.mxu0
  %v589 = vadd.f32 0.0, %v588
  %590 = vmatmul.f32.gmra.mxu0 %v51
  %v591 = vpop.f32.mrf.mxu0
  %v592 = vadd.f32 0.0, %v591
  %593 = vmatmul.f32.gmra.mxu0 %v53
  %v594 = vpop.f32.mrf.mxu0
  %v595 = vadd.f32 0.0, %v594
  %596 = vmatmul.f32.gmra.mxu0 %v55
  %v597 = vpop.f32.mrf.mxu0
  %v598 = vadd.f32 0.0, %v597
  %599 = vmatmul.f32.gmra.mxu0 %v57
  %v600 = vpop.f32.mrf.mxu0
  %v601 = vadd.f32 0.0, %v600
  %602 = vmatmul.f32.gmra.mxu0 %v59
  %v603 = vpop.f32.mrf.mxu0
  %v604 = vadd.f32 0.0, %v603
  %605 = vmatmul.f32.gmra.mxu0 %v61
  %v606 = vpop.f32.mrf.mxu0
  %v607 = vadd.f32 0.0, %v606
  %608 = vmatmul.f32.gmra.mxu0 %v63
  %v609 = vpop.f32.mrf.mxu0
  %v610 = vadd.f32 0.0, %v609
  %611 = vmatmul.f32.gmra.mxu0 %v65
  %v612 = vpop.f32.mrf.mxu0
  %v613 = vadd.f32 0.0, %v612
  %614 = vmatmul.f32.gmra.mxu0 %v67
  %v615 = vpop.f32.mrf.mxu0
  %v616 = vadd.f32 0.0, %v615
  %617 = vmatmul.f32.gmra.mxu0 %v69
  %v618 = vpop.f32.mrf.mxu0
  %v619 = vadd.f32 0.0, %v618
  %620 = vmatmul.f32.gmra.mxu0 %v71
  %v621 = vpop.f32.mrf.mxu0
  %v622 = vadd.f32 0.0, %v621
  %623 = vdwg.mxu0
  %624 = vmatpush.msra.mxu0 0.0
  %625 = vmatpush.msra.mxu0 0.0
  %626 = vmatpush.msra.mxu0 0.0
  %627 = vmatpush.msra.mxu0 0.0
  %628 = vmatpush.msra.mxu0 0.0
  %629 = vmatpush.msra.mxu0 0.0
  %630 = vmatpush.msra.mxu0 0.0
  %631 = vmatpush.msra.mxu0 %v319
  %632 = vmatpush.msra.mxu0 %v226
  %633 = vmatpush.msra.mxu0 %v224
  %634 = vmatpush.msra.mxu0 %v222
  %635 = vmatpush.msra.mxu0 %v220
  %636 = vmatpush.msra.mxu0 %v218
  %637 = vmatpush.msra.mxu0 %v216
  %638 = vmatpush.msra.mxu0 %v214
  %639 = vmatpush.msra.mxu0 %v212
  %640 = vmatmul.f32.gmra.mxu0 %v231
  %v641 = vpop.f32.mrf.mxu0
  %v642 = vadd.f32 %v541, %v641
  %643 = vmatmul.f32.gmra.mxu0 %v234
  %v644 = vpop.f32.mrf.mxu0
  %v645 = vadd.f32 %v544, %v644
  %646 = vmatmul.f32.gmra.mxu0 %v237
  %v647 = vpop.f32.mrf.mxu0
  %v648 = vadd.f32 %v547, %v647
  %649 = vmatmul.f32.gmra.mxu0 %v240
  %v650 = vpop.f32.mrf.mxu0
  %v651 = vadd.f32 %v550, %v650
  %652 = vmatmul.f32.gmra.mxu0 %v243
  %v653 = vpop.f32.mrf.mxu0
  %v654 = vadd.f32 %v553, %v653
  %655 = vmatmul.f32.gmra.mxu0 %v246
  %v656 = vpop.f32.mrf.mxu0
  %v657 = vadd.f32 %v556, %v656
  %658 = vmatmul.f32.gmra.mxu0 %v249
  %v659 = vpop.f32.mrf.mxu0
  %v660 = vadd.f32 %v559, %v659
  %661 = vmatmul.f32.gmra.mxu0 %v252
  %v662 = vpop.f32.mrf.mxu0
  %v663 = vadd.f32 %v562, %v662
  %664 = vmatmul.f32.gmra.mxu0 %v255
  %v665 = vpop.f32.mrf.mxu0
  %v666 = vadd.f32 %v565, %v665
  %667 = vmatmul.f32.gmra.mxu0 %v258
  %v668 = vpop.f32.mrf.mxu0
  %v669 = vadd.f32 %v568, %v668
  %670 = vmatmul.f32.gmra.mxu0 %v261
  %v671 = vpop.f32.mrf.mxu0
  %v672 = vadd.f32 %v571, %v671
  %673 = vmatmul.f32.gmra.mxu0 %v264
  %v674 = vpop.f32.mrf.mxu0
  %v675 = vadd.f32 %v574, %v674
  %676 = vmatmul.f32.gmra.mxu0 %v267
  %v677 = vpop.f32.mrf.mxu0
  %v678 = vadd.f32 %v577, %v677
  %679 = vmatmul.f32.gmra.mxu0 %v270
  %v680 = vpop.f32.mrf.mxu0
  %v681 = vadd.f32 %v580, %v680
  %682 = vmatmul.f32.gmra.mxu0 %v273
  %v683 = vpop.f32.mrf.mxu0
  %v684 = vadd.f32 %v583, %v683
  %685 = vmatmul.f32.gmra.mxu0 %v276
  %v686 = vpop.f32.mrf.mxu0
  %v687 = vadd.f32 %v586, %v686
  %688 = vmatmul.f32.gmra.mxu0 %v279
  %v689 = vpop.f32.mrf.mxu0
  %v690 = vadd.f32 %v589, %v689
  %691 = vmatmul.f32.gmra.mxu0 %v282
  %v692 = vpop.f32.mrf.mxu0
  %v693 = vadd.f32 %v592, %v692
  %694 = vmatmul.f32.gmra.mxu0 %v285
  %v695 = vpop.f32.mrf.mxu0
  %v696 = vadd.f32 %v595, %v695
  %697 = vmatmul.f32.gmra.mxu0 %v288
  %v698 = vpop.f32.mrf.mxu0
  %v699 = vadd.f32 %v598, %v698
  %700 = vmatmul.f32.gmra.mxu0 %v291
  %v701 = vpop.f32.mrf.mxu0
  %v702 = vadd.f32 %v601, %v701
  %703 = vmatmul.f32.gmra.mxu0 %v294
  %v704 = vpop.f32.mrf.mxu0
  %v705 = vadd.f32 %v604, %v704
  %706 = vmatmul.f32.gmra.mxu0 %v297
  %v707 = vpop.f32.mrf.mxu0
  %v708 = vadd.f32 %v607, %v707
  %709 = vmatmul.f32.gmra.mxu0 %v300
  %v710 = vpop.f32.mrf.mxu0
  %v711 = vadd.f32 %v610, %v710
  %712 = vmatmul.f32.gmra.mxu0 %v303
  %v713 = vpop.f32.mrf.mxu0
  %v714 = vadd.f32 %v613, %v713
  %715 = vmatmul.f32.gmra.mxu0 %v306
  %v716 = vpop.f32.mrf.mxu0
  %v717 = vadd.f32 %v616, %v716
  %718 = vmatmul.f32.gmra.mxu0 %v309
  %v719 = vpop.f32.mrf.mxu0
  %v720 = vadd.f32 %v619, %v719
  %721 = vmatmul.f32.gmra.mxu0 %v312
  %v722 = vpop.f32.mrf.mxu0
  %v723 = vadd.f32 %v622, %v722
  %724 = vdwg.mxu0
  %v725 = vmul.f32 %v440, %v123
  %v726 = vmul.f32 %v642, %v124
  %v727 = vmul.f32 %v443, %v125
  %v728 = vmul.f32 %v645, %v126
  %v729 = vmul.f32 %v446, %v127
  %v730 = vmul.f32 %v648, %v128
  %v731 = vmul.f32 %v449, %v129
  %v732 = vmul.f32 %v651, %v130
  %v733 = vmul.f32 %v452, %v131
  %v734 = vmul.f32 %v654, %v132
  %v735 = vmul.f32 %v455, %v133
  %v736 = vmul.f32 %v657, %v134
  %v737 = vmul.f32 %v458, %v135
  %v738 = vmul.f32 %v660, %v136
  %v739 = vmul.f32 %v461, %v137
  %v740 = vmul.f32 %v663, %v138
  %v741 = vmul.f32 %v464, %v139
  %v742 = vmul.f32 %v666, %v140
  %v743 = vmul.f32 %v467, %v141
  %v744 = vmul.f32 %v669, %v142
  %v745 = vmul.f32 %v470, %v143
  %v746 = vmul.f32 %v672, %v144
  %v747 = vmul.f32 %v473, %v145
  %v748 = vmul.f32 %v675, %v146
  %v749 = vmul.f32 %v476, %v147
  %v750 = vmul.f32 %v678, %v148
  %v751 = vmul.f32 %v479, %v149
  %v752 = vmul.f32 %v681, %v150
  %v753 = vmul.f32 %v482, %v151
  %v754 = vmul.f32 %v684, %v152
  %v755 = vmul.f32 %v485, %v153
  %v756 = vmul.f32 %v687, %v154
  %v757 = vmul.f32 %v488, %v155
  %v758 = vmul.f32 %v690, %v156
  %v759 = vmul.f32 %v491, %v157
  %v760 = vmul.f32 %v693, %v158
  %v761 = vmul.f32 %v494, %v159
  %v762 = vmul.f32 %v696, %v160
  %v763 = vmul.f32 %v497, %v161
  %v764 = vmul.f32 %v699, %v162
  %v765 = vmul.f32 %v500, %v163
  %v766 = vmul.f32 %v702, %v164
  %v767 = vmul.f32 %v503, %v165
  %v768 = vmul.f32 %v705, %v166
  %v769 = vmul.f32 %v506, %v167
  %v770 = vmul.f32 %v708, %v168
  %v771 = vmul.f32 %v509, %v169
  %v772 = vmul.f32 %v711, %v170
  %v773 = vmul.f32 %v512, %v171
  %v774 = vmul.f32 %v714, %v172
  %v775 = vmul.f32 %v515, %v173
  %v776 = vmul.f32 %v717, %v174
  %v777 = vmul.f32 %v518, %v175
  %v778 = vmul.f32 %v720, %v176
  %v779 = vmul.f32 %v521, %v177
  %v780 = vmul.f32 %v723, %v178
  %v781 = vsub.f32 %v725, %v753
  %v782 = vsub.f32 %v726, %v754
  %v783 = vsub.f32 %v727, %v755
  %v784 = vsub.f32 %v728, %v756
  %v785 = vsub.f32 %v729, %v757
  %v786 = vsub.f32 %v730, %v758
  %v787 = vsub.f32 %v731, %v759
  %v788 = vsub.f32 %v732, %v760
  %v789 = vsub.f32 %v733, %v761
  %v790 = vsub.f32 %v734, %v762
  %v791 = vsub.f32 %v735, %v763
  %v792 = vsub.f32 %v736, %v764
  %v793 = vsub.f32 %v737, %v765
  %v794 = vsub.f32 %v738, %v766
  %v795 = vsub.f32 %v739, %v767
  %v796 = vsub.f32 %v740, %v768
  %v797 = vsub.f32 %v741, %v769
  %v798 = vsub.f32 %v742, %v770
  %v799 = vsub.f32 %v743, %v771
  %v800 = vsub.f32 %v744, %v772
  %v801 = vsub.f32 %v745, %v773
  %v802 = vsub.f32 %v746, %v774
  %v803 = vsub.f32 %v747, %v775
  %v804 = vsub.f32 %v748, %v776
  %v805 = vsub.f32 %v749, %v777
  %v806 = vsub.f32 %v750, %v778
  %v807 = vsub.f32 %v751, %v779
  %v808 = vsub.f32 %v752, %v780
  %v809 = vmul.f32 %v440, %v151
  %v810 = vmul.f32 %v642, %v152
  %v811 = vmul.f32 %v443, %v153
  %v812 = vmul.f32 %v645, %v154
  %v813 = vmul.f32 %v446, %v155
  %v814 = vmul.f32 %v648, %v156
  %v815 = vmul.f32 %v449, %v157
  %v816 = vmul.f32 %v651, %v158
  %v817 = vmul.f32 %v452, %v159
  %v818 = vmul.f32 %v654, %v160
  %v819 = vmul.f32 %v455, %v161
  %v820 = vmul.f32 %v657, %v162
  %v821 = vmul.f32 %v458, %v163
  %v822 = vmul.f32 %v660, %v164
  %v823 = vmul.f32 %v461, %v165
  %v824 = vmul.f32 %v663, %v166
  %v825 = vmul.f32 %v464, %v167
  %v826 = vmul.f32 %v666, %v168
  %v827 = vmul.f32 %v467, %v169
  %v828 = vmul.f32 %v669, %v170
  %v829 = vmul.f32 %v470, %v171
  %v830 = vmul.f32 %v672, %v172
  %v831 = vmul.f32 %v473, %v173
  %v832 = vmul.f32 %v675, %v174
  %v833 = vmul.f32 %v476, %v175
  %v834 = vmul.f32 %v678, %v176
  %v835 = vmul.f32 %v479, %v177
  %v836 = vmul.f32 %v681, %v178
  %v837 = vmul.f32 %v482, %v123
  %v838 = vmul.f32 %v684, %v124
  %v839 = vmul.f32 %v485, %v125
  %v840 = vmul.f32 %v687, %v126
  %v841 = vmul.f32 %v488, %v127
  %v842 = vmul.f32 %v690, %v128
  %v843 = vmul.f32 %v491, %v129
  %v844 = vmul.f32 %v693, %v130
  %v845 = vmul.f32 %v494, %v131
  %v846 = vmul.f32 %v696, %v132
  %v847 = vmul.f32 %v497, %v133
  %v848 = vmul.f32 %v699, %v134
  %v849 = vmul.f32 %v500, %v135
  %v850 = vmul.f32 %v702, %v136
  %v851 = vmul.f32 %v503, %v137
  %v852 = vmul.f32 %v705, %v138
  %v853 = vmul.f32 %v506, %v139
  %v854 = vmul.f32 %v708, %v140
  %v855 = vmul.f32 %v509, %v141
  %v856 = vmul.f32 %v711, %v142
  %v857 = vmul.f32 %v512, %v143
  %v858 = vmul.f32 %v714, %v144
  %v859 = vmul.f32 %v515, %v145
  %v860 = vmul.f32 %v717, %v146
  %v861 = vmul.f32 %v518, %v147
  %v862 = vmul.f32 %v720, %v148
  %v863 = vmul.f32 %v521, %v149
  %v864 = vmul.f32 %v723, %v150
  %v865 = vadd.f32 %v809, %v837
  %v866 = vadd.f32 %v810, %v838
  %v867 = vadd.f32 %v811, %v839
  %v868 = vadd.f32 %v812, %v840
  %v869 = vadd.f32 %v813, %v841
  %v870 = vadd.f32 %v814, %v842
  %v871 = vadd.f32 %v815, %v843
  %v872 = vadd.f32 %v816, %v844
  %v873 = vadd.f32 %v817, %v845
  %v874 = vadd.f32 %v818, %v846
  %v875 = vadd.f32 %v819, %v847
  %v876 = vadd.f32 %v820, %v848
  %v877 = vadd.f32 %v821, %v849
  %v878 = vadd.f32 %v822, %v850
  %v879 = vadd.f32 %v823, %v851
  %v880 = vadd.f32 %v824, %v852
  %v881 = vadd.f32 %v825, %v853
  %v882 = vadd.f32 %v826, %v854
  %v883 = vadd.f32 %v827, %v855
  %v884 = vadd.f32 %v828, %v856
  %v885 = vadd.f32 %v829, %v857
  %v886 = vadd.f32 %v830, %v858
  %v887 = vadd.f32 %v831, %v859
  %v888 = vadd.f32 %v832, %v860
  %v889 = vadd.f32 %v833, %v861
  %v890 = vadd.f32 %v834, %v862
  %v891 = vadd.f32 %v835, %v863
  %v892 = vadd.f32 %v836, %v864
  %vm893 = vcmask 785408
  %v895 = vsel %vm893, %v74, 0
  %v898 = vsel %vm893, %v76, 0
  %v901 = vsel %vm893, %v78, 0
  %v904 = vsel %vm893, %v80, 0
  %v907 = vsel %vm893, %v82, 0
  %v910 = vsel %vm893, %v84, 0
  %v913 = vsel %vm893, %v86, 0
  %v916 = vsel %vm893, %v88, 0
  %v919 = vsel %vm893, %v90, 0
  %v922 = vsel %vm893, %v92, 0
  %v925 = vsel %vm893, %v94, 0
  %v928 = vsel %vm893, %v96, 0
  %v931 = vsel %vm893, %v98, 0
  %v934 = vsel %vm893, %v100, 0
  %v937 = vsel %vm893, %v102, 0
  %v940 = vsel %vm893, %v104, 0
  %v943 = vsel %vm893, %v106, 0
  %v946 = vsel %vm893, %v108, 0
  %v949 = vsel %vm893, %v110, 0
  %v952 = vsel %vm893, %v112, 0
  %v955 = vsel %vm893, %v114, 0
  %v958 = vsel %vm893, %v116, 0
  %v961 = vsel %vm893, %v118, 0
  %v964 = vsel %vm893, %v120, 0
  %v967 = vsel %vm893, %v122, 0
  %969 = vmatpush.msra.mxu0 %v867
  %970 = vmatpush.msra.mxu0 %v865
  %971 = vmatpush.msra.mxu0 %v807
  %972 = vmatpush.msra.mxu0 %v805
  %973 = vmatpush.msra.mxu0 %v803
  %974 = vmatpush.msra.mxu0 %v801
  %975 = vmatpush.msra.mxu0 %v799
  %976 = vmatpush.msra.mxu0 %v797
  %977 = vmatpush.msra.mxu0 %v795
  %978 = vmatpush.msra.mxu0 %v793
  %979 = vmatpush.msra.mxu0 %v791
  %980 = vmatpush.msra.mxu0 %v789
  %981 = vmatpush.msra.mxu0 %v787
  %982 = vmatpush.msra.mxu0 %v785
  %983 = vmatpush.msra.mxu0 %v783
  %984 = vmatpush.msra.mxu0 %v781
  %985 = vmatmul.f32.gmra.mxu0 %v73
  %v986 = vpop.f32.mrf.mxu0
  %v987 = vadd.f32 0.0, %v986
  %988 = vmatmul.f32.gmra.mxu0 %v75
  %v989 = vpop.f32.mrf.mxu0
  %v990 = vadd.f32 0.0, %v989
  %991 = vmatmul.f32.gmra.mxu0 %v77
  %v992 = vpop.f32.mrf.mxu0
  %v993 = vadd.f32 0.0, %v992
  %994 = vmatmul.f32.gmra.mxu0 %v79
  %v995 = vpop.f32.mrf.mxu0
  %v996 = vadd.f32 0.0, %v995
  %997 = vmatmul.f32.gmra.mxu0 %v81
  %v998 = vpop.f32.mrf.mxu0
  %v999 = vadd.f32 0.0, %v998
  %1000 = vmatmul.f32.gmra.mxu0 %v83
  %v1001 = vpop.f32.mrf.mxu0
  %v1002 = vadd.f32 0.0, %v1001
  %1003 = vmatmul.f32.gmra.mxu0 %v85
  %v1004 = vpop.f32.mrf.mxu0
  %v1005 = vadd.f32 0.0, %v1004
  %1006 = vmatmul.f32.gmra.mxu0 %v87
  %v1007 = vpop.f32.mrf.mxu0
  %v1008 = vadd.f32 0.0, %v1007
  %1009 = vmatmul.f32.gmra.mxu0 %v89
  %v1010 = vpop.f32.mrf.mxu0
  %v1011 = vadd.f32 0.0, %v1010
  %1012 = vmatmul.f32.gmra.mxu0 %v91
  %v1013 = vpop.f32.mrf.mxu0
  %v1014 = vadd.f32 0.0, %v1013
  %1015 = vmatmul.f32.gmra.mxu0 %v93
  %v1016 = vpop.f32.mrf.mxu0
  %v1017 = vadd.f32 0.0, %v1016
  %1018 = vmatmul.f32.gmra.mxu0 %v95
  %v1019 = vpop.f32.mrf.mxu0
  %v1020 = vadd.f32 0.0, %v1019
  %1021 = vmatmul.f32.gmra.mxu0 %v97
  %v1022 = vpop.f32.mrf.mxu0
  %v1023 = vadd.f32 0.0, %v1022
  %1024 = vmatmul.f32.gmra.mxu0 %v99
  %v1025 = vpop.f32.mrf.mxu0
  %v1026 = vadd.f32 0.0, %v1025
  %1027 = vmatmul.f32.gmra.mxu0 %v101
  %v1028 = vpop.f32.mrf.mxu0
  %v1029 = vadd.f32 0.0, %v1028
  %1030 = vmatmul.f32.gmra.mxu0 %v103
  %v1031 = vpop.f32.mrf.mxu0
  %v1032 = vadd.f32 0.0, %v1031
  %1033 = vmatmul.f32.gmra.mxu0 %v105
  %v1034 = vpop.f32.mrf.mxu0
  %v1035 = vadd.f32 0.0, %v1034
  %1036 = vmatmul.f32.gmra.mxu0 %v107
  %v1037 = vpop.f32.mrf.mxu0
  %v1038 = vadd.f32 0.0, %v1037
  %1039 = vmatmul.f32.gmra.mxu0 %v109
  %v1040 = vpop.f32.mrf.mxu0
  %v1041 = vadd.f32 0.0, %v1040
  %1042 = vmatmul.f32.gmra.mxu0 %v111
  %v1043 = vpop.f32.mrf.mxu0
  %v1044 = vadd.f32 0.0, %v1043
  %1045 = vmatmul.f32.gmra.mxu0 %v113
  %v1046 = vpop.f32.mrf.mxu0
  %v1047 = vadd.f32 0.0, %v1046
  %1048 = vmatmul.f32.gmra.mxu0 %v115
  %v1049 = vpop.f32.mrf.mxu0
  %v1050 = vadd.f32 0.0, %v1049
  %1051 = vmatmul.f32.gmra.mxu0 %v117
  %v1052 = vpop.f32.mrf.mxu0
  %v1053 = vadd.f32 0.0, %v1052
  %1054 = vmatmul.f32.gmra.mxu0 %v119
  %v1055 = vpop.f32.mrf.mxu0
  %v1056 = vadd.f32 0.0, %v1055
  %1057 = vmatmul.f32.gmra.mxu0 %v121
  %v1058 = vpop.f32.mrf.mxu0
  %v1059 = vadd.f32 0.0, %v1058
  %1060 = vdwg.mxu0
  %1061 = vmatpush.msra.mxu0 0.0
  %1062 = vmatpush.msra.mxu0 0.0
  %1063 = vmatpush.msra.mxu0 0.0
  %1064 = vmatpush.msra.mxu0 0.0
  %1065 = vmatpush.msra.mxu0 %v891
  %1066 = vmatpush.msra.mxu0 %v889
  %1067 = vmatpush.msra.mxu0 %v887
  %1068 = vmatpush.msra.mxu0 %v885
  %1069 = vmatpush.msra.mxu0 %v883
  %1070 = vmatpush.msra.mxu0 %v881
  %1071 = vmatpush.msra.mxu0 %v879
  %1072 = vmatpush.msra.mxu0 %v877
  %1073 = vmatpush.msra.mxu0 %v875
  %1074 = vmatpush.msra.mxu0 %v873
  %1075 = vmatpush.msra.mxu0 %v871
  %1076 = vmatpush.msra.mxu0 %v869
  %1077 = vmatmul.f32.gmra.mxu0 %v895
  %v1078 = vpop.f32.mrf.mxu0
  %v1079 = vadd.f32 %v987, %v1078
  %1080 = vmatmul.f32.gmra.mxu0 %v898
  %v1081 = vpop.f32.mrf.mxu0
  %v1082 = vadd.f32 %v990, %v1081
  %1083 = vmatmul.f32.gmra.mxu0 %v901
  %v1084 = vpop.f32.mrf.mxu0
  %v1085 = vadd.f32 %v993, %v1084
  %1086 = vmatmul.f32.gmra.mxu0 %v904
  %v1087 = vpop.f32.mrf.mxu0
  %v1088 = vadd.f32 %v996, %v1087
  %1089 = vmatmul.f32.gmra.mxu0 %v907
  %v1090 = vpop.f32.mrf.mxu0
  %v1091 = vadd.f32 %v999, %v1090
  %1092 = vmatmul.f32.gmra.mxu0 %v910
  %v1093 = vpop.f32.mrf.mxu0
  %v1094 = vadd.f32 %v1002, %v1093
  %1095 = vmatmul.f32.gmra.mxu0 %v913
  %v1096 = vpop.f32.mrf.mxu0
  %v1097 = vadd.f32 %v1005, %v1096
  %1098 = vmatmul.f32.gmra.mxu0 %v916
  %v1099 = vpop.f32.mrf.mxu0
  %v1100 = vadd.f32 %v1008, %v1099
  %1101 = vmatmul.f32.gmra.mxu0 %v919
  %v1102 = vpop.f32.mrf.mxu0
  %v1103 = vadd.f32 %v1011, %v1102
  %1104 = vmatmul.f32.gmra.mxu0 %v922
  %v1105 = vpop.f32.mrf.mxu0
  %v1106 = vadd.f32 %v1014, %v1105
  %1107 = vmatmul.f32.gmra.mxu0 %v925
  %v1108 = vpop.f32.mrf.mxu0
  %v1109 = vadd.f32 %v1017, %v1108
  %1110 = vmatmul.f32.gmra.mxu0 %v928
  %v1111 = vpop.f32.mrf.mxu0
  %v1112 = vadd.f32 %v1020, %v1111
  %1113 = vmatmul.f32.gmra.mxu0 %v931
  %v1114 = vpop.f32.mrf.mxu0
  %v1115 = vadd.f32 %v1023, %v1114
  %1116 = vmatmul.f32.gmra.mxu0 %v934
  %v1117 = vpop.f32.mrf.mxu0
  %v1118 = vadd.f32 %v1026, %v1117
  %1119 = vmatmul.f32.gmra.mxu0 %v937
  %v1120 = vpop.f32.mrf.mxu0
  %v1121 = vadd.f32 %v1029, %v1120
  %1122 = vmatmul.f32.gmra.mxu0 %v940
  %v1123 = vpop.f32.mrf.mxu0
  %v1124 = vadd.f32 %v1032, %v1123
  %1125 = vmatmul.f32.gmra.mxu0 %v943
  %v1126 = vpop.f32.mrf.mxu0
  %v1127 = vadd.f32 %v1035, %v1126
  %1128 = vmatmul.f32.gmra.mxu0 %v946
  %v1129 = vpop.f32.mrf.mxu0
  %v1130 = vadd.f32 %v1038, %v1129
  %1131 = vmatmul.f32.gmra.mxu0 %v949
  %v1132 = vpop.f32.mrf.mxu0
  %v1133 = vadd.f32 %v1041, %v1132
  %1134 = vmatmul.f32.gmra.mxu0 %v952
  %v1135 = vpop.f32.mrf.mxu0
  %v1136 = vadd.f32 %v1044, %v1135
  %1137 = vmatmul.f32.gmra.mxu0 %v955
  %v1138 = vpop.f32.mrf.mxu0
  %v1139 = vadd.f32 %v1047, %v1138
  %1140 = vmatmul.f32.gmra.mxu0 %v958
  %v1141 = vpop.f32.mrf.mxu0
  %v1142 = vadd.f32 %v1050, %v1141
  %1143 = vmatmul.f32.gmra.mxu0 %v961
  %v1144 = vpop.f32.mrf.mxu0
  %v1145 = vadd.f32 %v1053, %v1144
  %1146 = vmatmul.f32.gmra.mxu0 %v964
  %v1147 = vpop.f32.mrf.mxu0
  %v1148 = vadd.f32 %v1056, %v1147
  %1149 = vmatmul.f32.gmra.mxu0 %v967
  %v1150 = vpop.f32.mrf.mxu0
  %v1151 = vadd.f32 %v1059, %v1150
  %1152 = vdwg.mxu0
  %1153 = vmatpush.msra.mxu0 %v868
  %1154 = vmatpush.msra.mxu0 %v866
  %1155 = vmatpush.msra.mxu0 %v808
  %1156 = vmatpush.msra.mxu0 %v806
  %1157 = vmatpush.msra.mxu0 %v804
  %1158 = vmatpush.msra.mxu0 %v802
  %1159 = vmatpush.msra.mxu0 %v800
  %1160 = vmatpush.msra.mxu0 %v798
  %1161 = vmatpush.msra.mxu0 %v796
  %1162 = vmatpush.msra.mxu0 %v794
  %1163 = vmatpush.msra.mxu0 %v792
  %1164 = vmatpush.msra.mxu0 %v790
  %1165 = vmatpush.msra.mxu0 %v788
  %1166 = vmatpush.msra.mxu0 %v786
  %1167 = vmatpush.msra.mxu0 %v784
  %1168 = vmatpush.msra.mxu0 %v782
  %1169 = vmatmul.f32.gmra.mxu0 %v73
  %v1170 = vpop.f32.mrf.mxu0
  %v1171 = vadd.f32 0.0, %v1170
  %1172 = vmatmul.f32.gmra.mxu0 %v75
  %v1173 = vpop.f32.mrf.mxu0
  %v1174 = vadd.f32 0.0, %v1173
  %1175 = vmatmul.f32.gmra.mxu0 %v77
  %v1176 = vpop.f32.mrf.mxu0
  %v1177 = vadd.f32 0.0, %v1176
  %1178 = vmatmul.f32.gmra.mxu0 %v79
  %v1179 = vpop.f32.mrf.mxu0
  %v1180 = vadd.f32 0.0, %v1179
  %1181 = vmatmul.f32.gmra.mxu0 %v81
  %v1182 = vpop.f32.mrf.mxu0
  %v1183 = vadd.f32 0.0, %v1182
  %1184 = vmatmul.f32.gmra.mxu0 %v83
  %v1185 = vpop.f32.mrf.mxu0
  %v1186 = vadd.f32 0.0, %v1185
  %1187 = vmatmul.f32.gmra.mxu0 %v85
  %v1188 = vpop.f32.mrf.mxu0
  %v1189 = vadd.f32 0.0, %v1188
  %1190 = vmatmul.f32.gmra.mxu0 %v87
  %v1191 = vpop.f32.mrf.mxu0
  %v1192 = vadd.f32 0.0, %v1191
  %1193 = vmatmul.f32.gmra.mxu0 %v89
  %v1194 = vpop.f32.mrf.mxu0
  %v1195 = vadd.f32 0.0, %v1194
  %1196 = vmatmul.f32.gmra.mxu0 %v91
  %v1197 = vpop.f32.mrf.mxu0
  %v1198 = vadd.f32 0.0, %v1197
  %1199 = vmatmul.f32.gmra.mxu0 %v93
  %v1200 = vpop.f32.mrf.mxu0
  %v1201 = vadd.f32 0.0, %v1200
  %1202 = vmatmul.f32.gmra.mxu0 %v95
  %v1203 = vpop.f32.mrf.mxu0
  %v1204 = vadd.f32 0.0, %v1203
  %1205 = vmatmul.f32.gmra.mxu0 %v97
  %v1206 = vpop.f32.mrf.mxu0
  %v1207 = vadd.f32 0.0, %v1206
  %1208 = vmatmul.f32.gmra.mxu0 %v99
  %v1209 = vpop.f32.mrf.mxu0
  %v1210 = vadd.f32 0.0, %v1209
  %1211 = vmatmul.f32.gmra.mxu0 %v101
  %v1212 = vpop.f32.mrf.mxu0
  %v1213 = vadd.f32 0.0, %v1212
  %1214 = vmatmul.f32.gmra.mxu0 %v103
  %v1215 = vpop.f32.mrf.mxu0
  %v1216 = vadd.f32 0.0, %v1215
  %1217 = vmatmul.f32.gmra.mxu0 %v105
  %v1218 = vpop.f32.mrf.mxu0
  %v1219 = vadd.f32 0.0, %v1218
  %1220 = vmatmul.f32.gmra.mxu0 %v107
  %v1221 = vpop.f32.mrf.mxu0
  %v1222 = vadd.f32 0.0, %v1221
  %1223 = vmatmul.f32.gmra.mxu0 %v109
  %v1224 = vpop.f32.mrf.mxu0
  %v1225 = vadd.f32 0.0, %v1224
  %1226 = vmatmul.f32.gmra.mxu0 %v111
  %v1227 = vpop.f32.mrf.mxu0
  %v1228 = vadd.f32 0.0, %v1227
  %1229 = vmatmul.f32.gmra.mxu0 %v113
  %v1230 = vpop.f32.mrf.mxu0
  %v1231 = vadd.f32 0.0, %v1230
  %1232 = vmatmul.f32.gmra.mxu0 %v115
  %v1233 = vpop.f32.mrf.mxu0
  %v1234 = vadd.f32 0.0, %v1233
  %1235 = vmatmul.f32.gmra.mxu0 %v117
  %v1236 = vpop.f32.mrf.mxu0
  %v1237 = vadd.f32 0.0, %v1236
  %1238 = vmatmul.f32.gmra.mxu0 %v119
  %v1239 = vpop.f32.mrf.mxu0
  %v1240 = vadd.f32 0.0, %v1239
  %1241 = vmatmul.f32.gmra.mxu0 %v121
  %v1242 = vpop.f32.mrf.mxu0
  %v1243 = vadd.f32 0.0, %v1242
  %1244 = vdwg.mxu0
  %1245 = vmatpush.msra.mxu0 0.0
  %1246 = vmatpush.msra.mxu0 0.0
  %1247 = vmatpush.msra.mxu0 0.0
  %1248 = vmatpush.msra.mxu0 0.0
  %1249 = vmatpush.msra.mxu0 %v892
  %1250 = vmatpush.msra.mxu0 %v890
  %1251 = vmatpush.msra.mxu0 %v888
  %1252 = vmatpush.msra.mxu0 %v886
  %1253 = vmatpush.msra.mxu0 %v884
  %1254 = vmatpush.msra.mxu0 %v882
  %1255 = vmatpush.msra.mxu0 %v880
  %1256 = vmatpush.msra.mxu0 %v878
  %1257 = vmatpush.msra.mxu0 %v876
  %1258 = vmatpush.msra.mxu0 %v874
  %1259 = vmatpush.msra.mxu0 %v872
  %1260 = vmatpush.msra.mxu0 %v870
  %1261 = vmatmul.f32.gmra.mxu0 %v895
  %v1262 = vpop.f32.mrf.mxu0
  %v1263 = vadd.f32 %v1171, %v1262
  %1264 = vmatmul.f32.gmra.mxu0 %v898
  %v1265 = vpop.f32.mrf.mxu0
  %v1266 = vadd.f32 %v1174, %v1265
  %1267 = vmatmul.f32.gmra.mxu0 %v901
  %v1268 = vpop.f32.mrf.mxu0
  %v1269 = vadd.f32 %v1177, %v1268
  %1270 = vmatmul.f32.gmra.mxu0 %v904
  %v1271 = vpop.f32.mrf.mxu0
  %v1272 = vadd.f32 %v1180, %v1271
  %1273 = vmatmul.f32.gmra.mxu0 %v907
  %v1274 = vpop.f32.mrf.mxu0
  %v1275 = vadd.f32 %v1183, %v1274
  %1276 = vmatmul.f32.gmra.mxu0 %v910
  %v1277 = vpop.f32.mrf.mxu0
  %v1278 = vadd.f32 %v1186, %v1277
  %1279 = vmatmul.f32.gmra.mxu0 %v913
  %v1280 = vpop.f32.mrf.mxu0
  %v1281 = vadd.f32 %v1189, %v1280
  %1282 = vmatmul.f32.gmra.mxu0 %v916
  %v1283 = vpop.f32.mrf.mxu0
  %v1284 = vadd.f32 %v1192, %v1283
  %1285 = vmatmul.f32.gmra.mxu0 %v919
  %v1286 = vpop.f32.mrf.mxu0
  %v1287 = vadd.f32 %v1195, %v1286
  %1288 = vmatmul.f32.gmra.mxu0 %v922
  %v1289 = vpop.f32.mrf.mxu0
  %v1290 = vadd.f32 %v1198, %v1289
  %1291 = vmatmul.f32.gmra.mxu0 %v925
  %v1292 = vpop.f32.mrf.mxu0
  %v1293 = vadd.f32 %v1201, %v1292
  %1294 = vmatmul.f32.gmra.mxu0 %v928
  %v1295 = vpop.f32.mrf.mxu0
  %v1296 = vadd.f32 %v1204, %v1295
  %1297 = vmatmul.f32.gmra.mxu0 %v931
  %v1298 = vpop.f32.mrf.mxu0
  %v1299 = vadd.f32 %v1207, %v1298
  %1300 = vmatmul.f32.gmra.mxu0 %v934
  %v1301 = vpop.f32.mrf.mxu0
  %v1302 = vadd.f32 %v1210, %v1301
  %1303 = vmatmul.f32.gmra.mxu0 %v937
  %v1304 = vpop.f32.mrf.mxu0
  %v1305 = vadd.f32 %v1213, %v1304
  %1306 = vmatmul.f32.gmra.mxu0 %v940
  %v1307 = vpop.f32.mrf.mxu0
  %v1308 = vadd.f32 %v1216, %v1307
  %1309 = vmatmul.f32.gmra.mxu0 %v943
  %v1310 = vpop.f32.mrf.mxu0
  %v1311 = vadd.f32 %v1219, %v1310
  %1312 = vmatmul.f32.gmra.mxu0 %v946
  %v1313 = vpop.f32.mrf.mxu0
  %v1314 = vadd.f32 %v1222, %v1313
  %1315 = vmatmul.f32.gmra.mxu0 %v949
  %v1316 = vpop.f32.mrf.mxu0
  %v1317 = vadd.f32 %v1225, %v1316
  %1318 = vmatmul.f32.gmra.mxu0 %v952
  %v1319 = vpop.f32.mrf.mxu0
  %v1320 = vadd.f32 %v1228, %v1319
  %1321 = vmatmul.f32.gmra.mxu0 %v955
  %v1322 = vpop.f32.mrf.mxu0
  %v1323 = vadd.f32 %v1231, %v1322
  %1324 = vmatmul.f32.gmra.mxu0 %v958
  %v1325 = vpop.f32.mrf.mxu0
  %v1326 = vadd.f32 %v1234, %v1325
  %1327 = vmatmul.f32.gmra.mxu0 %v961
  %v1328 = vpop.f32.mrf.mxu0
  %v1329 = vadd.f32 %v1237, %v1328
  %1330 = vmatmul.f32.gmra.mxu0 %v964
  %v1331 = vpop.f32.mrf.mxu0
  %v1332 = vadd.f32 %v1240, %v1331
  %1333 = vmatmul.f32.gmra.mxu0 %v967
  %v1334 = vpop.f32.mrf.mxu0
  %v1335 = vadd.f32 %v1243, %v1334
  %1336 = vdwg.mxu0
  %1337 = vst [vmem:[%s4] sm:$0xff] %v1079
  %1338 = vst [vmem:[%s4 + $0x8] sm:$0xff] %v1263
  %1339 = vst [vmem:[%s4 + $0x10] sm:$0xff] %v1082
  %1340 = vst [vmem:[%s4 + $0x18] sm:$0xff] %v1266
  %1341 = vst [vmem:[%s4 + $0x20] sm:$0xff] %v1085
  %1342 = vst [vmem:[%s4 + $0x28] sm:$0xff] %v1269
  %1343 = vst [vmem:[%s4 + $0x30] sm:$0xff] %v1088
  %1344 = vst [vmem:[%s4 + $0x38] sm:$0xff] %v1272
  %1345 = vst [vmem:[%s4 + $0x40] sm:$0xff] %v1091
  %1346 = vst [vmem:[%s4 + $0x48] sm:$0xff] %v1275
  %1347 = vst [vmem:[%s4 + $0x50] sm:$0xff] %v1094
  %1348 = vst [vmem:[%s4 + $0x58] sm:$0xff] %v1278
  %1349 = vst [vmem:[%s4 + $0x60] sm:$0xff] %v1097
  %1350 = vst [vmem:[%s4 + $0x68] sm:$0xff] %v1281
  %1351 = vst [vmem:[%s4 + $0x70] sm:$0xff] %v1100
  %1352 = vst [vmem:[%s4 + $0x78] sm:$0xff] %v1284
  %1353 = vst [vmem:[%s4 + $0x80] sm:$0xff] %v1103
  %1354 = vst [vmem:[%s4 + $0x88] sm:$0xff] %v1287
  %1355 = vst [vmem:[%s4 + $0x90] sm:$0xff] %v1106
  %1356 = vst [vmem:[%s4 + $0x98] sm:$0xff] %v1290
  %1357 = vst [vmem:[%s4 + $0xa0] sm:$0xff] %v1109
  %1358 = vst [vmem:[%s4 + $0xa8] sm:$0xff] %v1293
  %1359 = vst [vmem:[%s4 + $0xb0] sm:$0xff] %v1112
  %1360 = vst [vmem:[%s4 + $0xb8] sm:$0xff] %v1296
  %1361 = vst [vmem:[%s4 + $0xc0] sm:$0xff] %v1115
  %1362 = vst [vmem:[%s4 + $0xc8] sm:$0xff] %v1299
  %1363 = vst [vmem:[%s4 + $0xd0] sm:$0xff] %v1118
  %1364 = vst [vmem:[%s4 + $0xd8] sm:$0xff] %v1302
  %1365 = vst [vmem:[%s4 + $0xe0] sm:$0xff] %v1121
  %1366 = vst [vmem:[%s4 + $0xe8] sm:$0xff] %v1305
  %1367 = vst [vmem:[%s4 + $0xf0] sm:$0xff] %v1124
  %1368 = vst [vmem:[%s4 + $0xf8] sm:$0xff] %v1308
  %1369 = vst [vmem:[%s4 + $0x100] sm:$0xff] %v1127
  %1370 = vst [vmem:[%s4 + $0x108] sm:$0xff] %v1311
  %1371 = vst [vmem:[%s4 + $0x110] sm:$0xff] %v1130
  %1372 = vst [vmem:[%s4 + $0x118] sm:$0xff] %v1314
  %1373 = vst [vmem:[%s4 + $0x120] sm:$0xff] %v1133
  %1374 = vst [vmem:[%s4 + $0x128] sm:$0xff] %v1317
  %1375 = vst [vmem:[%s4 + $0x130] sm:$0xff] %v1136
  %1376 = vst [vmem:[%s4 + $0x138] sm:$0xff] %v1320
  %1377 = vst [vmem:[%s4 + $0x140] sm:$0xff] %v1139
  %1378 = vst [vmem:[%s4 + $0x148] sm:$0xff] %v1323
  %1379 = vst [vmem:[%s4 + $0x150] sm:$0xff] %v1142
  %1380 = vst [vmem:[%s4 + $0x158] sm:$0xff] %v1326
  %1381 = vst [vmem:[%s4 + $0x160] sm:$0xff] %v1145
  %1382 = vst [vmem:[%s4 + $0x168] sm:$0xff] %v1329
  %1383 = vst [vmem:[%s4 + $0x170] sm:$0xff] %v1148
  %1384 = vst [vmem:[%s4 + $0x178] sm:$0xff] %v1332
  %1385 = vst [vmem:[%s4 + $0x180] sm:$0xf] %v1151
  %1386 = vst [vmem:[%s4 + $0x188] sm:$0xf] %v1335
  %s1387 = scalar_lea.vmem %s0, 400
  %v1388 = vld [vmem:[%s1387] sm:$0xff]
  %v1389 = vld [vmem:[%s1387 + $0x8] sm:$0xff]
  %v1390 = vld [vmem:[%s1387 + $0x10] sm:$0xff]
  %v1391 = vld [vmem:[%s1387 + $0x18] sm:$0xff]
  %v1392 = vld [vmem:[%s1387 + $0x20] sm:$0xff]
  %v1393 = vld [vmem:[%s1387 + $0x28] sm:$0xff]
  %v1394 = vld [vmem:[%s1387 + $0x30] sm:$0xff]
  %v1395 = vld [vmem:[%s1387 + $0x38] sm:$0xff]
  %v1396 = vld [vmem:[%s1387 + $0x40] sm:$0xff]
  %v1397 = vld [vmem:[%s1387 + $0x48] sm:$0xff]
  %v1398 = vld [vmem:[%s1387 + $0x50] sm:$0xff]
  %v1399 = vld [vmem:[%s1387 + $0x58] sm:$0xff]
  %v1400 = vld [vmem:[%s1387 + $0x60] sm:$0xff]
  %v1401 = vld [vmem:[%s1387 + $0x68] sm:$0xff]
  %v1402 = vld [vmem:[%s1387 + $0x70] sm:$0xff]
  %v1403 = vld [vmem:[%s1387 + $0x78] sm:$0xff]
  %v1404 = vld [vmem:[%s1387 + $0x80] sm:$0xff]
  %v1405 = vld [vmem:[%s1387 + $0x88] sm:$0xff]
  %v1406 = vld [vmem:[%s1387 + $0x90] sm:$0xff]
  %v1407 = vld [vmem:[%s1387 + $0x98] sm:$0xff]
  %v1408 = vld [vmem:[%s1387 + $0xa0] sm:$0xff]
  %v1409 = vld [vmem:[%s1387 + $0xa8] sm:$0xff]
  %v1410 = vld [vmem:[%s1387 + $0xb0] sm:$0xff]
  %v1411 = vld [vmem:[%s1387 + $0xb8] sm:$0xff]
  %v1412 = vld [vmem:[%s1387 + $0xc0] sm:$0xff]
  %v1413 = vld [vmem:[%s1387 + $0xc8] sm:$0xff]
  %v1414 = vld [vmem:[%s1387 + $0xd0] sm:$0xff]
  %v1415 = vld [vmem:[%s1387 + $0xd8] sm:$0xff]
  %v1416 = vld [vmem:[%s1387 + $0xe0] sm:$0xff]
  %v1417 = vld [vmem:[%s1387 + $0xe8] sm:$0xff]
  %v1418 = vld [vmem:[%s1387 + $0xf0] sm:$0xff]
  %v1419 = vld [vmem:[%s1387 + $0xf8] sm:$0xff]
  %v1420 = vld [vmem:[%s1387 + $0x100] sm:$0xff]
  %v1421 = vld [vmem:[%s1387 + $0x108] sm:$0xff]
  %v1422 = vld [vmem:[%s1387 + $0x110] sm:$0xff]
  %v1423 = vld [vmem:[%s1387 + $0x118] sm:$0xff]
  %v1424 = vld [vmem:[%s1387 + $0x120] sm:$0xff]
  %v1425 = vld [vmem:[%s1387 + $0x128] sm:$0xff]
  %v1426 = vld [vmem:[%s1387 + $0x130] sm:$0xff]
  %v1427 = vld [vmem:[%s1387 + $0x138] sm:$0xff]
  %v1428 = vld [vmem:[%s1387 + $0x140] sm:$0xff]
  %v1429 = vld [vmem:[%s1387 + $0x148] sm:$0xff]
  %v1430 = vld [vmem:[%s1387 + $0x150] sm:$0xff]
  %v1431 = vld [vmem:[%s1387 + $0x158] sm:$0xff]
  %v1432 = vld [vmem:[%s1387 + $0x160] sm:$0xff]
  %v1433 = vld [vmem:[%s1387 + $0x168] sm:$0xff]
  %v1434 = vld [vmem:[%s1387 + $0x170] sm:$0xff]
  %v1435 = vld [vmem:[%s1387 + $0x178] sm:$0xff]
  %v1436 = vld [vmem:[%s1387 + $0x180] sm:$0xf]
  %v1437 = vld [vmem:[%s1387 + $0x188] sm:$0xf]
  %v1439 = vsel %vm314, %v1436, 0
  %v1442 = vsel %vm314, %v1437, 0
  %1444 = vmatpush.msra.mxu0 %v1418
  %1445 = vmatpush.msra.mxu0 %v1416
  %1446 = vmatpush.msra.mxu0 %v1414
  %1447 = vmatpush.msra.mxu0 %v1412
  %1448 = vmatpush.msra.mxu0 %v1410
  %1449 = vmatpush.msra.mxu0 %v1408
  %1450 = vmatpush.msra.mxu0 %v1406
  %1451 = vmatpush.msra.mxu0 %v1404
  %1452 = vmatpush.msra.mxu0 %v1402
  %1453 = vmatpush.msra.mxu0 %v1400
  %1454 = vmatpush.msra.mxu0 %v1398
  %1455 = vmatpush.msra.mxu0 %v1396
  %1456 = vmatpush.msra.mxu0 %v1394
  %1457 = vmatpush.msra.mxu0 %v1392
  %1458 = vmatpush.msra.mxu0 %v1390
  %1459 = vmatpush.msra.mxu0 %v1388
  %1460 = vmatmul.f32.gmra.mxu0 %v17
  %v1461 = vpop.f32.mrf.mxu0
  %v1462 = vadd.f32 0.0, %v1461
  %1463 = vmatmul.f32.gmra.mxu0 %v19
  %v1464 = vpop.f32.mrf.mxu0
  %v1465 = vadd.f32 0.0, %v1464
  %1466 = vmatmul.f32.gmra.mxu0 %v21
  %v1467 = vpop.f32.mrf.mxu0
  %v1468 = vadd.f32 0.0, %v1467
  %1469 = vmatmul.f32.gmra.mxu0 %v23
  %v1470 = vpop.f32.mrf.mxu0
  %v1471 = vadd.f32 0.0, %v1470
  %1472 = vmatmul.f32.gmra.mxu0 %v25
  %v1473 = vpop.f32.mrf.mxu0
  %v1474 = vadd.f32 0.0, %v1473
  %1475 = vmatmul.f32.gmra.mxu0 %v27
  %v1476 = vpop.f32.mrf.mxu0
  %v1477 = vadd.f32 0.0, %v1476
  %1478 = vmatmul.f32.gmra.mxu0 %v29
  %v1479 = vpop.f32.mrf.mxu0
  %v1480 = vadd.f32 0.0, %v1479
  %1481 = vmatmul.f32.gmra.mxu0 %v31
  %v1482 = vpop.f32.mrf.mxu0
  %v1483 = vadd.f32 0.0, %v1482
  %1484 = vmatmul.f32.gmra.mxu0 %v33
  %v1485 = vpop.f32.mrf.mxu0
  %v1486 = vadd.f32 0.0, %v1485
  %1487 = vmatmul.f32.gmra.mxu0 %v35
  %v1488 = vpop.f32.mrf.mxu0
  %v1489 = vadd.f32 0.0, %v1488
  %1490 = vmatmul.f32.gmra.mxu0 %v37
  %v1491 = vpop.f32.mrf.mxu0
  %v1492 = vadd.f32 0.0, %v1491
  %1493 = vmatmul.f32.gmra.mxu0 %v39
  %v1494 = vpop.f32.mrf.mxu0
  %v1495 = vadd.f32 0.0, %v1494
  %1496 = vmatmul.f32.gmra.mxu0 %v41
  %v1497 = vpop.f32.mrf.mxu0
  %v1498 = vadd.f32 0.0, %v1497
  %1499 = vmatmul.f32.gmra.mxu0 %v43
  %v1500 = vpop.f32.mrf.mxu0
  %v1501 = vadd.f32 0.0, %v1500
  %1502 = vmatmul.f32.gmra.mxu0 %v45
  %v1503 = vpop.f32.mrf.mxu0
  %v1504 = vadd.f32 0.0, %v1503
  %1505 = vmatmul.f32.gmra.mxu0 %v47
  %v1506 = vpop.f32.mrf.mxu0
  %v1507 = vadd.f32 0.0, %v1506
  %1508 = vmatmul.f32.gmra.mxu0 %v49
  %v1509 = vpop.f32.mrf.mxu0
  %v1510 = vadd.f32 0.0, %v1509
  %1511 = vmatmul.f32.gmra.mxu0 %v51
  %v1512 = vpop.f32.mrf.mxu0
  %v1513 = vadd.f32 0.0, %v1512
  %1514 = vmatmul.f32.gmra.mxu0 %v53
  %v1515 = vpop.f32.mrf.mxu0
  %v1516 = vadd.f32 0.0, %v1515
  %1517 = vmatmul.f32.gmra.mxu0 %v55
  %v1518 = vpop.f32.mrf.mxu0
  %v1519 = vadd.f32 0.0, %v1518
  %1520 = vmatmul.f32.gmra.mxu0 %v57
  %v1521 = vpop.f32.mrf.mxu0
  %v1522 = vadd.f32 0.0, %v1521
  %1523 = vmatmul.f32.gmra.mxu0 %v59
  %v1524 = vpop.f32.mrf.mxu0
  %v1525 = vadd.f32 0.0, %v1524
  %1526 = vmatmul.f32.gmra.mxu0 %v61
  %v1527 = vpop.f32.mrf.mxu0
  %v1528 = vadd.f32 0.0, %v1527
  %1529 = vmatmul.f32.gmra.mxu0 %v63
  %v1530 = vpop.f32.mrf.mxu0
  %v1531 = vadd.f32 0.0, %v1530
  %1532 = vmatmul.f32.gmra.mxu0 %v65
  %v1533 = vpop.f32.mrf.mxu0
  %v1534 = vadd.f32 0.0, %v1533
  %1535 = vmatmul.f32.gmra.mxu0 %v67
  %v1536 = vpop.f32.mrf.mxu0
  %v1537 = vadd.f32 0.0, %v1536
  %1538 = vmatmul.f32.gmra.mxu0 %v69
  %v1539 = vpop.f32.mrf.mxu0
  %v1540 = vadd.f32 0.0, %v1539
  %1541 = vmatmul.f32.gmra.mxu0 %v71
  %v1542 = vpop.f32.mrf.mxu0
  %v1543 = vadd.f32 0.0, %v1542
  %1544 = vdwg.mxu0
  %1545 = vmatpush.msra.mxu0 0.0
  %1546 = vmatpush.msra.mxu0 0.0
  %1547 = vmatpush.msra.mxu0 0.0
  %1548 = vmatpush.msra.mxu0 0.0
  %1549 = vmatpush.msra.mxu0 0.0
  %1550 = vmatpush.msra.mxu0 0.0
  %1551 = vmatpush.msra.mxu0 0.0
  %1552 = vmatpush.msra.mxu0 %v1439
  %1553 = vmatpush.msra.mxu0 %v1434
  %1554 = vmatpush.msra.mxu0 %v1432
  %1555 = vmatpush.msra.mxu0 %v1430
  %1556 = vmatpush.msra.mxu0 %v1428
  %1557 = vmatpush.msra.mxu0 %v1426
  %1558 = vmatpush.msra.mxu0 %v1424
  %1559 = vmatpush.msra.mxu0 %v1422
  %1560 = vmatpush.msra.mxu0 %v1420
  %1561 = vmatmul.f32.gmra.mxu0 %v231
  %v1562 = vpop.f32.mrf.mxu0
  %v1563 = vadd.f32 %v1462, %v1562
  %1564 = vmatmul.f32.gmra.mxu0 %v234
  %v1565 = vpop.f32.mrf.mxu0
  %v1566 = vadd.f32 %v1465, %v1565
  %1567 = vmatmul.f32.gmra.mxu0 %v237
  %v1568 = vpop.f32.mrf.mxu0
  %v1569 = vadd.f32 %v1468, %v1568
  %1570 = vmatmul.f32.gmra.mxu0 %v240
  %v1571 = vpop.f32.mrf.mxu0
  %v1572 = vadd.f32 %v1471, %v1571
  %1573 = vmatmul.f32.gmra.mxu0 %v243
  %v1574 = vpop.f32.mrf.mxu0
  %v1575 = vadd.f32 %v1474, %v1574
  %1576 = vmatmul.f32.gmra.mxu0 %v246
  %v1577 = vpop.f32.mrf.mxu0
  %v1578 = vadd.f32 %v1477, %v1577
  %1579 = vmatmul.f32.gmra.mxu0 %v249
  %v1580 = vpop.f32.mrf.mxu0
  %v1581 = vadd.f32 %v1480, %v1580
  %1582 = vmatmul.f32.gmra.mxu0 %v252
  %v1583 = vpop.f32.mrf.mxu0
  %v1584 = vadd.f32 %v1483, %v1583
  %1585 = vmatmul.f32.gmra.mxu0 %v255
  %v1586 = vpop.f32.mrf.mxu0
  %v1587 = vadd.f32 %v1486, %v1586
  %1588 = vmatmul.f32.gmra.mxu0 %v258
  %v1589 = vpop.f32.mrf.mxu0
  %v1590 = vadd.f32 %v1489, %v1589
  %1591 = vmatmul.f32.gmra.mxu0 %v261
  %v1592 = vpop.f32.mrf.mxu0
  %v1593 = vadd.f32 %v1492, %v1592
  %1594 = vmatmul.f32.gmra.mxu0 %v264
  %v1595 = vpop.f32.mrf.mxu0
  %v1596 = vadd.f32 %v1495, %v1595
  %1597 = vmatmul.f32.gmra.mxu0 %v267
  %v1598 = vpop.f32.mrf.mxu0
  %v1599 = vadd.f32 %v1498, %v1598
  %1600 = vmatmul.f32.gmra.mxu0 %v270
  %v1601 = vpop.f32.mrf.mxu0
  %v1602 = vadd.f32 %v1501, %v1601
  %1603 = vmatmul.f32.gmra.mxu0 %v273
  %v1604 = vpop.f32.mrf.mxu0
  %v1605 = vadd.f32 %v1504, %v1604
  %1606 = vmatmul.f32.gmra.mxu0 %v276
  %v1607 = vpop.f32.mrf.mxu0
  %v1608 = vadd.f32 %v1507, %v1607
  %1609 = vmatmul.f32.gmra.mxu0 %v279
  %v1610 = vpop.f32.mrf.mxu0
  %v1611 = vadd.f32 %v1510, %v1610
  %1612 = vmatmul.f32.gmra.mxu0 %v282
  %v1613 = vpop.f32.mrf.mxu0
  %v1614 = vadd.f32 %v1513, %v1613
  %1615 = vmatmul.f32.gmra.mxu0 %v285
  %v1616 = vpop.f32.mrf.mxu0
  %v1617 = vadd.f32 %v1516, %v1616
  %1618 = vmatmul.f32.gmra.mxu0 %v288
  %v1619 = vpop.f32.mrf.mxu0
  %v1620 = vadd.f32 %v1519, %v1619
  %1621 = vmatmul.f32.gmra.mxu0 %v291
  %v1622 = vpop.f32.mrf.mxu0
  %v1623 = vadd.f32 %v1522, %v1622
  %1624 = vmatmul.f32.gmra.mxu0 %v294
  %v1625 = vpop.f32.mrf.mxu0
  %v1626 = vadd.f32 %v1525, %v1625
  %1627 = vmatmul.f32.gmra.mxu0 %v297
  %v1628 = vpop.f32.mrf.mxu0
  %v1629 = vadd.f32 %v1528, %v1628
  %1630 = vmatmul.f32.gmra.mxu0 %v300
  %v1631 = vpop.f32.mrf.mxu0
  %v1632 = vadd.f32 %v1531, %v1631
  %1633 = vmatmul.f32.gmra.mxu0 %v303
  %v1634 = vpop.f32.mrf.mxu0
  %v1635 = vadd.f32 %v1534, %v1634
  %1636 = vmatmul.f32.gmra.mxu0 %v306
  %v1637 = vpop.f32.mrf.mxu0
  %v1638 = vadd.f32 %v1537, %v1637
  %1639 = vmatmul.f32.gmra.mxu0 %v309
  %v1640 = vpop.f32.mrf.mxu0
  %v1641 = vadd.f32 %v1540, %v1640
  %1642 = vmatmul.f32.gmra.mxu0 %v312
  %v1643 = vpop.f32.mrf.mxu0
  %v1644 = vadd.f32 %v1543, %v1643
  %1645 = vdwg.mxu0
  %1646 = vmatpush.msra.mxu0 %v1419
  %1647 = vmatpush.msra.mxu0 %v1417
  %1648 = vmatpush.msra.mxu0 %v1415
  %1649 = vmatpush.msra.mxu0 %v1413
  %1650 = vmatpush.msra.mxu0 %v1411
  %1651 = vmatpush.msra.mxu0 %v1409
  %1652 = vmatpush.msra.mxu0 %v1407
  %1653 = vmatpush.msra.mxu0 %v1405
  %1654 = vmatpush.msra.mxu0 %v1403
  %1655 = vmatpush.msra.mxu0 %v1401
  %1656 = vmatpush.msra.mxu0 %v1399
  %1657 = vmatpush.msra.mxu0 %v1397
  %1658 = vmatpush.msra.mxu0 %v1395
  %1659 = vmatpush.msra.mxu0 %v1393
  %1660 = vmatpush.msra.mxu0 %v1391
  %1661 = vmatpush.msra.mxu0 %v1389
  %1662 = vmatmul.f32.gmra.mxu0 %v17
  %v1663 = vpop.f32.mrf.mxu0
  %v1664 = vadd.f32 0.0, %v1663
  %1665 = vmatmul.f32.gmra.mxu0 %v19
  %v1666 = vpop.f32.mrf.mxu0
  %v1667 = vadd.f32 0.0, %v1666
  %1668 = vmatmul.f32.gmra.mxu0 %v21
  %v1669 = vpop.f32.mrf.mxu0
  %v1670 = vadd.f32 0.0, %v1669
  %1671 = vmatmul.f32.gmra.mxu0 %v23
  %v1672 = vpop.f32.mrf.mxu0
  %v1673 = vadd.f32 0.0, %v1672
  %1674 = vmatmul.f32.gmra.mxu0 %v25
  %v1675 = vpop.f32.mrf.mxu0
  %v1676 = vadd.f32 0.0, %v1675
  %1677 = vmatmul.f32.gmra.mxu0 %v27
  %v1678 = vpop.f32.mrf.mxu0
  %v1679 = vadd.f32 0.0, %v1678
  %1680 = vmatmul.f32.gmra.mxu0 %v29
  %v1681 = vpop.f32.mrf.mxu0
  %v1682 = vadd.f32 0.0, %v1681
  %1683 = vmatmul.f32.gmra.mxu0 %v31
  %v1684 = vpop.f32.mrf.mxu0
  %v1685 = vadd.f32 0.0, %v1684
  %1686 = vmatmul.f32.gmra.mxu0 %v33
  %v1687 = vpop.f32.mrf.mxu0
  %v1688 = vadd.f32 0.0, %v1687
  %1689 = vmatmul.f32.gmra.mxu0 %v35
  %v1690 = vpop.f32.mrf.mxu0
  %v1691 = vadd.f32 0.0, %v1690
  %1692 = vmatmul.f32.gmra.mxu0 %v37
  %v1693 = vpop.f32.mrf.mxu0
  %v1694 = vadd.f32 0.0, %v1693
  %1695 = vmatmul.f32.gmra.mxu0 %v39
  %v1696 = vpop.f32.mrf.mxu0
  %v1697 = vadd.f32 0.0, %v1696
  %1698 = vmatmul.f32.gmra.mxu0 %v41
  %v1699 = vpop.f32.mrf.mxu0
  %v1700 = vadd.f32 0.0, %v1699
  %1701 = vmatmul.f32.gmra.mxu0 %v43
  %v1702 = vpop.f32.mrf.mxu0
  %v1703 = vadd.f32 0.0, %v1702
  %1704 = vmatmul.f32.gmra.mxu0 %v45
  %v1705 = vpop.f32.mrf.mxu0
  %v1706 = vadd.f32 0.0, %v1705
  %1707 = vmatmul.f32.gmra.mxu0 %v47
  %v1708 = vpop.f32.mrf.mxu0
  %v1709 = vadd.f32 0.0, %v1708
  %1710 = vmatmul.f32.gmra.mxu0 %v49
  %v1711 = vpop.f32.mrf.mxu0
  %v1712 = vadd.f32 0.0, %v1711
  %1713 = vmatmul.f32.gmra.mxu0 %v51
  %v1714 = vpop.f32.mrf.mxu0
  %v1715 = vadd.f32 0.0, %v1714
  %1716 = vmatmul.f32.gmra.mxu0 %v53
  %v1717 = vpop.f32.mrf.mxu0
  %v1718 = vadd.f32 0.0, %v1717
  %1719 = vmatmul.f32.gmra.mxu0 %v55
  %v1720 = vpop.f32.mrf.mxu0
  %v1721 = vadd.f32 0.0, %v1720
  %1722 = vmatmul.f32.gmra.mxu0 %v57
  %v1723 = vpop.f32.mrf.mxu0
  %v1724 = vadd.f32 0.0, %v1723
  %1725 = vmatmul.f32.gmra.mxu0 %v59
  %v1726 = vpop.f32.mrf.mxu0
  %v1727 = vadd.f32 0.0, %v1726
  %1728 = vmatmul.f32.gmra.mxu0 %v61
  %v1729 = vpop.f32.mrf.mxu0
  %v1730 = vadd.f32 0.0, %v1729
  %1731 = vmatmul.f32.gmra.mxu0 %v63
  %v1732 = vpop.f32.mrf.mxu0
  %v1733 = vadd.f32 0.0, %v1732
  %1734 = vmatmul.f32.gmra.mxu0 %v65
  %v1735 = vpop.f32.mrf.mxu0
  %v1736 = vadd.f32 0.0, %v1735
  %1737 = vmatmul.f32.gmra.mxu0 %v67
  %v1738 = vpop.f32.mrf.mxu0
  %v1739 = vadd.f32 0.0, %v1738
  %1740 = vmatmul.f32.gmra.mxu0 %v69
  %v1741 = vpop.f32.mrf.mxu0
  %v1742 = vadd.f32 0.0, %v1741
  %1743 = vmatmul.f32.gmra.mxu0 %v71
  %v1744 = vpop.f32.mrf.mxu0
  %v1745 = vadd.f32 0.0, %v1744
  %1746 = vdwg.mxu0
  %1747 = vmatpush.msra.mxu0 0.0
  %1748 = vmatpush.msra.mxu0 0.0
  %1749 = vmatpush.msra.mxu0 0.0
  %1750 = vmatpush.msra.mxu0 0.0
  %1751 = vmatpush.msra.mxu0 0.0
  %1752 = vmatpush.msra.mxu0 0.0
  %1753 = vmatpush.msra.mxu0 0.0
  %1754 = vmatpush.msra.mxu0 %v1442
  %1755 = vmatpush.msra.mxu0 %v1435
  %1756 = vmatpush.msra.mxu0 %v1433
  %1757 = vmatpush.msra.mxu0 %v1431
  %1758 = vmatpush.msra.mxu0 %v1429
  %1759 = vmatpush.msra.mxu0 %v1427
  %1760 = vmatpush.msra.mxu0 %v1425
  %1761 = vmatpush.msra.mxu0 %v1423
  %1762 = vmatpush.msra.mxu0 %v1421
  %1763 = vmatmul.f32.gmra.mxu0 %v231
  %v1764 = vpop.f32.mrf.mxu0
  %v1765 = vadd.f32 %v1664, %v1764
  %1766 = vmatmul.f32.gmra.mxu0 %v234
  %v1767 = vpop.f32.mrf.mxu0
  %v1768 = vadd.f32 %v1667, %v1767
  %1769 = vmatmul.f32.gmra.mxu0 %v237
  %v1770 = vpop.f32.mrf.mxu0
  %v1771 = vadd.f32 %v1670, %v1770
  %1772 = vmatmul.f32.gmra.mxu0 %v240
  %v1773 = vpop.f32.mrf.mxu0
  %v1774 = vadd.f32 %v1673, %v1773
  %1775 = vmatmul.f32.gmra.mxu0 %v243
  %v1776 = vpop.f32.mrf.mxu0
  %v1777 = vadd.f32 %v1676, %v1776
  %1778 = vmatmul.f32.gmra.mxu0 %v246
  %v1779 = vpop.f32.mrf.mxu0
  %v1780 = vadd.f32 %v1679, %v1779
  %1781 = vmatmul.f32.gmra.mxu0 %v249
  %v1782 = vpop.f32.mrf.mxu0
  %v1783 = vadd.f32 %v1682, %v1782
  %1784 = vmatmul.f32.gmra.mxu0 %v252
  %v1785 = vpop.f32.mrf.mxu0
  %v1786 = vadd.f32 %v1685, %v1785
  %1787 = vmatmul.f32.gmra.mxu0 %v255
  %v1788 = vpop.f32.mrf.mxu0
  %v1789 = vadd.f32 %v1688, %v1788
  %1790 = vmatmul.f32.gmra.mxu0 %v258
  %v1791 = vpop.f32.mrf.mxu0
  %v1792 = vadd.f32 %v1691, %v1791
  %1793 = vmatmul.f32.gmra.mxu0 %v261
  %v1794 = vpop.f32.mrf.mxu0
  %v1795 = vadd.f32 %v1694, %v1794
  %1796 = vmatmul.f32.gmra.mxu0 %v264
  %v1797 = vpop.f32.mrf.mxu0
  %v1798 = vadd.f32 %v1697, %v1797
  %1799 = vmatmul.f32.gmra.mxu0 %v267
  %v1800 = vpop.f32.mrf.mxu0
  %v1801 = vadd.f32 %v1700, %v1800
  %1802 = vmatmul.f32.gmra.mxu0 %v270
  %v1803 = vpop.f32.mrf.mxu0
  %v1804 = vadd.f32 %v1703, %v1803
  %1805 = vmatmul.f32.gmra.mxu0 %v273
  %v1806 = vpop.f32.mrf.mxu0
  %v1807 = vadd.f32 %v1706, %v1806
  %1808 = vmatmul.f32.gmra.mxu0 %v276
  %v1809 = vpop.f32.mrf.mxu0
  %v1810 = vadd.f32 %v1709, %v1809
  %1811 = vmatmul.f32.gmra.mxu0 %v279
  %v1812 = vpop.f32.mrf.mxu0
  %v1813 = vadd.f32 %v1712, %v1812
  %1814 = vmatmul.f32.gmra.mxu0 %v282
  %v1815 = vpop.f32.mrf.mxu0
  %v1816 = vadd.f32 %v1715, %v1815
  %1817 = vmatmul.f32.gmra.mxu0 %v285
  %v1818 = vpop.f32.mrf.mxu0
  %v1819 = vadd.f32 %v1718, %v1818
  %1820 = vmatmul.f32.gmra.mxu0 %v288
  %v1821 = vpop.f32.mrf.mxu0
  %v1822 = vadd.f32 %v1721, %v1821
  %1823 = vmatmul.f32.gmra.mxu0 %v291
  %v1824 = vpop.f32.mrf.mxu0
  %v1825 = vadd.f32 %v1724, %v1824
  %1826 = vmatmul.f32.gmra.mxu0 %v294
  %v1827 = vpop.f32.mrf.mxu0
  %v1828 = vadd.f32 %v1727, %v1827
  %1829 = vmatmul.f32.gmra.mxu0 %v297
  %v1830 = vpop.f32.mrf.mxu0
  %v1831 = vadd.f32 %v1730, %v1830
  %1832 = vmatmul.f32.gmra.mxu0 %v300
  %v1833 = vpop.f32.mrf.mxu0
  %v1834 = vadd.f32 %v1733, %v1833
  %1835 = vmatmul.f32.gmra.mxu0 %v303
  %v1836 = vpop.f32.mrf.mxu0
  %v1837 = vadd.f32 %v1736, %v1836
  %1838 = vmatmul.f32.gmra.mxu0 %v306
  %v1839 = vpop.f32.mrf.mxu0
  %v1840 = vadd.f32 %v1739, %v1839
  %1841 = vmatmul.f32.gmra.mxu0 %v309
  %v1842 = vpop.f32.mrf.mxu0
  %v1843 = vadd.f32 %v1742, %v1842
  %1844 = vmatmul.f32.gmra.mxu0 %v312
  %v1845 = vpop.f32.mrf.mxu0
  %v1846 = vadd.f32 %v1745, %v1845
  %1847 = vdwg.mxu0
  %v1848 = vmul.f32 %v1563, %v123
  %v1849 = vmul.f32 %v1765, %v124
  %v1850 = vmul.f32 %v1566, %v125
  %v1851 = vmul.f32 %v1768, %v126
  %v1852 = vmul.f32 %v1569, %v127
  %v1853 = vmul.f32 %v1771, %v128
  %v1854 = vmul.f32 %v1572, %v129
  %v1855 = vmul.f32 %v1774, %v130
  %v1856 = vmul.f32 %v1575, %v131
  %v1857 = vmul.f32 %v1777, %v132
  %v1858 = vmul.f32 %v1578, %v133
  %v1859 = vmul.f32 %v1780, %v134
  %v1860 = vmul.f32 %v1581, %v135
  %v1861 = vmul.f32 %v1783, %v136
  %v1862 = vmul.f32 %v1584, %v137
  %v1863 = vmul.f32 %v1786, %v138
  %v1864 = vmul.f32 %v1587, %v139
  %v1865 = vmul.f32 %v1789, %v140
  %v1866 = vmul.f32 %v1590, %v141
  %v1867 = vmul.f32 %v1792, %v142
  %v1868 = vmul.f32 %v1593, %v143
  %v1869 = vmul.f32 %v1795, %v144
  %v1870 = vmul.f32 %v1596, %v145
  %v1871 = vmul.f32 %v1798, %v146
  %v1872 = vmul.f32 %v1599, %v147
  %v1873 = vmul.f32 %v1801, %v148
  %v1874 = vmul.f32 %v1602, %v149
  %v1875 = vmul.f32 %v1804, %v150
  %v1876 = vmul.f32 %v1605, %v151
  %v1877 = vmul.f32 %v1807, %v152
  %v1878 = vmul.f32 %v1608, %v153
  %v1879 = vmul.f32 %v1810, %v154
  %v1880 = vmul.f32 %v1611, %v155
  %v1881 = vmul.f32 %v1813, %v156
  %v1882 = vmul.f32 %v1614, %v157
  %v1883 = vmul.f32 %v1816, %v158
  %v1884 = vmul.f32 %v1617, %v159
  %v1885 = vmul.f32 %v1819, %v160
  %v1886 = vmul.f32 %v1620, %v161
  %v1887 = vmul.f32 %v1822, %v162
  %v1888 = vmul.f32 %v1623, %v163
  %v1889 = vmul.f32 %v1825, %v164
  %v1890 = vmul.f32 %v1626, %v165
  %v1891 = vmul.f32 %v1828, %v166
  %v1892 = vmul.f32 %v1629, %v167
  %v1893 = vmul.f32 %v1831, %v168
  %v1894 = vmul.f32 %v1632, %v169
  %v1895 = vmul.f32 %v1834, %v170
  %v1896 = vmul.f32 %v1635, %v171
  %v1897 = vmul.f32 %v1837, %v172
  %v1898 = vmul.f32 %v1638, %v173
  %v1899 = vmul.f32 %v1840, %v174
  %v1900 = vmul.f32 %v1641, %v175
  %v1901 = vmul.f32 %v1843, %v176
  %v1902 = vmul.f32 %v1644, %v177
  %v1903 = vmul.f32 %v1846, %v178
  %v1904 = vsub.f32 %v1848, %v1876
  %v1905 = vsub.f32 %v1849, %v1877
  %v1906 = vsub.f32 %v1850, %v1878
  %v1907 = vsub.f32 %v1851, %v1879
  %v1908 = vsub.f32 %v1852, %v1880
  %v1909 = vsub.f32 %v1853, %v1881
  %v1910 = vsub.f32 %v1854, %v1882
  %v1911 = vsub.f32 %v1855, %v1883
  %v1912 = vsub.f32 %v1856, %v1884
  %v1913 = vsub.f32 %v1857, %v1885
  %v1914 = vsub.f32 %v1858, %v1886
  %v1915 = vsub.f32 %v1859, %v1887
  %v1916 = vsub.f32 %v1860, %v1888
  %v1917 = vsub.f32 %v1861, %v1889
  %v1918 = vsub.f32 %v1862, %v1890
  %v1919 = vsub.f32 %v1863, %v1891
  %v1920 = vsub.f32 %v1864, %v1892
  %v1921 = vsub.f32 %v1865, %v1893
  %v1922 = vsub.f32 %v1866, %v1894
  %v1923 = vsub.f32 %v1867, %v1895
  %v1924 = vsub.f32 %v1868, %v1896
  %v1925 = vsub.f32 %v1869, %v1897
  %v1926 = vsub.f32 %v1870, %v1898
  %v1927 = vsub.f32 %v1871, %v1899
  %v1928 = vsub.f32 %v1872, %v1900
  %v1929 = vsub.f32 %v1873, %v1901
  %v1930 = vsub.f32 %v1874, %v1902
  %v1931 = vsub.f32 %v1875, %v1903
  %v1932 = vmul.f32 %v1563, %v151
  %v1933 = vmul.f32 %v1765, %v152
  %v1934 = vmul.f32 %v1566, %v153
  %v1935 = vmul.f32 %v1768, %v154
  %v1936 = vmul.f32 %v1569, %v155
  %v1937 = vmul.f32 %v1771, %v156
  %v1938 = vmul.f32 %v1572, %v157
  %v1939 = vmul.f32 %v1774, %v158
  %v1940 = vmul.f32 %v1575, %v159
  %v1941 = vmul.f32 %v1777, %v160
  %v1942 = vmul.f32 %v1578, %v161
  %v1943 = vmul.f32 %v1780, %v162
  %v1944 = vmul.f32 %v1581, %v163
  %v1945 = vmul.f32 %v1783, %v164
  %v1946 = vmul.f32 %v1584, %v165
  %v1947 = vmul.f32 %v1786, %v166
  %v1948 = vmul.f32 %v1587, %v167
  %v1949 = vmul.f32 %v1789, %v168
  %v1950 = vmul.f32 %v1590, %v169
  %v1951 = vmul.f32 %v1792, %v170
  %v1952 = vmul.f32 %v1593, %v171
  %v1953 = vmul.f32 %v1795, %v172
  %v1954 = vmul.f32 %v1596, %v173
  %v1955 = vmul.f32 %v1798, %v174
  %v1956 = vmul.f32 %v1599, %v175
  %v1957 = vmul.f32 %v1801, %v176
  %v1958 = vmul.f32 %v1602, %v177
  %v1959 = vmul.f32 %v1804, %v178
  %v1960 = vmul.f32 %v1605, %v123
  %v1961 = vmul.f32 %v1807, %v124
  %v1962 = vmul.f32 %v1608, %v125
  %v1963 = vmul.f32 %v1810, %v126
  %v1964 = vmul.f32 %v1611, %v127
  %v1965 = vmul.f32 %v1813, %v128
  %v1966 = vmul.f32 %v1614, %v129
  %v1967 = vmul.f32 %v1816, %v130
  %v1968 = vmul.f32 %v1617, %v131
  %v1969 = vmul.f32 %v1819, %v132
  %v1970 = vmul.f32 %v1620, %v133
  %v1971 = vmul.f32 %v1822, %v134
  %v1972 = vmul.f32 %v1623, %v135
  %v1973 = vmul.f32 %v1825, %v136
  %v1974 = vmul.f32 %v1626, %v137
  %v1975 = vmul.f32 %v1828, %v138
  %v1976 = vmul.f32 %v1629, %v139
  %v1977 = vmul.f32 %v1831, %v140
  %v1978 = vmul.f32 %v1632, %v141
  %v1979 = vmul.f32 %v1834, %v142
  %v1980 = vmul.f32 %v1635, %v143
  %v1981 = vmul.f32 %v1837, %v144
  %v1982 = vmul.f32 %v1638, %v145
  %v1983 = vmul.f32 %v1840, %v146
  %v1984 = vmul.f32 %v1641, %v147
  %v1985 = vmul.f32 %v1843, %v148
  %v1986 = vmul.f32 %v1644, %v149
  %v1987 = vmul.f32 %v1846, %v150
  %v1988 = vadd.f32 %v1932, %v1960
  %v1989 = vadd.f32 %v1933, %v1961
  %v1990 = vadd.f32 %v1934, %v1962
  %v1991 = vadd.f32 %v1935, %v1963
  %v1992 = vadd.f32 %v1936, %v1964
  %v1993 = vadd.f32 %v1937, %v1965
  %v1994 = vadd.f32 %v1938, %v1966
  %v1995 = vadd.f32 %v1939, %v1967
  %v1996 = vadd.f32 %v1940, %v1968
  %v1997 = vadd.f32 %v1941, %v1969
  %v1998 = vadd.f32 %v1942, %v1970
  %v1999 = vadd.f32 %v1943, %v1971
  %v2000 = vadd.f32 %v1944, %v1972
  %v2001 = vadd.f32 %v1945, %v1973
  %v2002 = vadd.f32 %v1946, %v1974
  %v2003 = vadd.f32 %v1947, %v1975
  %v2004 = vadd.f32 %v1948, %v1976
  %v2005 = vadd.f32 %v1949, %v1977
  %v2006 = vadd.f32 %v1950, %v1978
  %v2007 = vadd.f32 %v1951, %v1979
  %v2008 = vadd.f32 %v1952, %v1980
  %v2009 = vadd.f32 %v1953, %v1981
  %v2010 = vadd.f32 %v1954, %v1982
  %v2011 = vadd.f32 %v1955, %v1983
  %v2012 = vadd.f32 %v1956, %v1984
  %v2013 = vadd.f32 %v1957, %v1985
  %v2014 = vadd.f32 %v1958, %v1986
  %v2015 = vadd.f32 %v1959, %v1987
  %2016 = vmatpush.msra.mxu0 %v1990
  %2017 = vmatpush.msra.mxu0 %v1988
  %2018 = vmatpush.msra.mxu0 %v1930
  %2019 = vmatpush.msra.mxu0 %v1928
  %2020 = vmatpush.msra.mxu0 %v1926
  %2021 = vmatpush.msra.mxu0 %v1924
  %2022 = vmatpush.msra.mxu0 %v1922
  %2023 = vmatpush.msra.mxu0 %v1920
  %2024 = vmatpush.msra.mxu0 %v1918
  %2025 = vmatpush.msra.mxu0 %v1916
  %2026 = vmatpush.msra.mxu0 %v1914
  %2027 = vmatpush.msra.mxu0 %v1912
  %2028 = vmatpush.msra.mxu0 %v1910
  %2029 = vmatpush.msra.mxu0 %v1908
  %2030 = vmatpush.msra.mxu0 %v1906
  %2031 = vmatpush.msra.mxu0 %v1904
  %2032 = vmatmul.f32.gmra.mxu0 %v73
  %v2033 = vpop.f32.mrf.mxu0
  %v2034 = vadd.f32 0.0, %v2033
  %2035 = vmatmul.f32.gmra.mxu0 %v75
  %v2036 = vpop.f32.mrf.mxu0
  %v2037 = vadd.f32 0.0, %v2036
  %2038 = vmatmul.f32.gmra.mxu0 %v77
  %v2039 = vpop.f32.mrf.mxu0
  %v2040 = vadd.f32 0.0, %v2039
  %2041 = vmatmul.f32.gmra.mxu0 %v79
  %v2042 = vpop.f32.mrf.mxu0
  %v2043 = vadd.f32 0.0, %v2042
  %2044 = vmatmul.f32.gmra.mxu0 %v81
  %v2045 = vpop.f32.mrf.mxu0
  %v2046 = vadd.f32 0.0, %v2045
  %2047 = vmatmul.f32.gmra.mxu0 %v83
  %v2048 = vpop.f32.mrf.mxu0
  %v2049 = vadd.f32 0.0, %v2048
  %2050 = vmatmul.f32.gmra.mxu0 %v85
  %v2051 = vpop.f32.mrf.mxu0
  %v2052 = vadd.f32 0.0, %v2051
  %2053 = vmatmul.f32.gmra.mxu0 %v87
  %v2054 = vpop.f32.mrf.mxu0
  %v2055 = vadd.f32 0.0, %v2054
  %2056 = vmatmul.f32.gmra.mxu0 %v89
  %v2057 = vpop.f32.mrf.mxu0
  %v2058 = vadd.f32 0.0, %v2057
  %2059 = vmatmul.f32.gmra.mxu0 %v91
  %v2060 = vpop.f32.mrf.mxu0
  %v2061 = vadd.f32 0.0, %v2060
  %2062 = vmatmul.f32.gmra.mxu0 %v93
  %v2063 = vpop.f32.mrf.mxu0
  %v2064 = vadd.f32 0.0, %v2063
  %2065 = vmatmul.f32.gmra.mxu0 %v95
  %v2066 = vpop.f32.mrf.mxu0
  %v2067 = vadd.f32 0.0, %v2066
  %2068 = vmatmul.f32.gmra.mxu0 %v97
  %v2069 = vpop.f32.mrf.mxu0
  %v2070 = vadd.f32 0.0, %v2069
  %2071 = vmatmul.f32.gmra.mxu0 %v99
  %v2072 = vpop.f32.mrf.mxu0
  %v2073 = vadd.f32 0.0, %v2072
  %2074 = vmatmul.f32.gmra.mxu0 %v101
  %v2075 = vpop.f32.mrf.mxu0
  %v2076 = vadd.f32 0.0, %v2075
  %2077 = vmatmul.f32.gmra.mxu0 %v103
  %v2078 = vpop.f32.mrf.mxu0
  %v2079 = vadd.f32 0.0, %v2078
  %2080 = vmatmul.f32.gmra.mxu0 %v105
  %v2081 = vpop.f32.mrf.mxu0
  %v2082 = vadd.f32 0.0, %v2081
  %2083 = vmatmul.f32.gmra.mxu0 %v107
  %v2084 = vpop.f32.mrf.mxu0
  %v2085 = vadd.f32 0.0, %v2084
  %2086 = vmatmul.f32.gmra.mxu0 %v109
  %v2087 = vpop.f32.mrf.mxu0
  %v2088 = vadd.f32 0.0, %v2087
  %2089 = vmatmul.f32.gmra.mxu0 %v111
  %v2090 = vpop.f32.mrf.mxu0
  %v2091 = vadd.f32 0.0, %v2090
  %2092 = vmatmul.f32.gmra.mxu0 %v113
  %v2093 = vpop.f32.mrf.mxu0
  %v2094 = vadd.f32 0.0, %v2093
  %2095 = vmatmul.f32.gmra.mxu0 %v115
  %v2096 = vpop.f32.mrf.mxu0
  %v2097 = vadd.f32 0.0, %v2096
  %2098 = vmatmul.f32.gmra.mxu0 %v117
  %v2099 = vpop.f32.mrf.mxu0
  %v2100 = vadd.f32 0.0, %v2099
  %2101 = vmatmul.f32.gmra.mxu0 %v119
  %v2102 = vpop.f32.mrf.mxu0
  %v2103 = vadd.f32 0.0, %v2102
  %2104 = vmatmul.f32.gmra.mxu0 %v121
  %v2105 = vpop.f32.mrf.mxu0
  %v2106 = vadd.f32 0.0, %v2105
  %2107 = vdwg.mxu0
  %2108 = vmatpush.msra.mxu0 0.0
  %2109 = vmatpush.msra.mxu0 0.0
  %2110 = vmatpush.msra.mxu0 0.0
  %2111 = vmatpush.msra.mxu0 0.0
  %2112 = vmatpush.msra.mxu0 %v2014
  %2113 = vmatpush.msra.mxu0 %v2012
  %2114 = vmatpush.msra.mxu0 %v2010
  %2115 = vmatpush.msra.mxu0 %v2008
  %2116 = vmatpush.msra.mxu0 %v2006
  %2117 = vmatpush.msra.mxu0 %v2004
  %2118 = vmatpush.msra.mxu0 %v2002
  %2119 = vmatpush.msra.mxu0 %v2000
  %2120 = vmatpush.msra.mxu0 %v1998
  %2121 = vmatpush.msra.mxu0 %v1996
  %2122 = vmatpush.msra.mxu0 %v1994
  %2123 = vmatpush.msra.mxu0 %v1992
  %2124 = vmatmul.f32.gmra.mxu0 %v895
  %v2125 = vpop.f32.mrf.mxu0
  %v2126 = vadd.f32 %v2034, %v2125
  %2127 = vmatmul.f32.gmra.mxu0 %v898
  %v2128 = vpop.f32.mrf.mxu0
  %v2129 = vadd.f32 %v2037, %v2128
  %2130 = vmatmul.f32.gmra.mxu0 %v901
  %v2131 = vpop.f32.mrf.mxu0
  %v2132 = vadd.f32 %v2040, %v2131
  %2133 = vmatmul.f32.gmra.mxu0 %v904
  %v2134 = vpop.f32.mrf.mxu0
  %v2135 = vadd.f32 %v2043, %v2134
  %2136 = vmatmul.f32.gmra.mxu0 %v907
  %v2137 = vpop.f32.mrf.mxu0
  %v2138 = vadd.f32 %v2046, %v2137
  %2139 = vmatmul.f32.gmra.mxu0 %v910
  %v2140 = vpop.f32.mrf.mxu0
  %v2141 = vadd.f32 %v2049, %v2140
  %2142 = vmatmul.f32.gmra.mxu0 %v913
  %v2143 = vpop.f32.mrf.mxu0
  %v2144 = vadd.f32 %v2052, %v2143
  %2145 = vmatmul.f32.gmra.mxu0 %v916
  %v2146 = vpop.f32.mrf.mxu0
  %v2147 = vadd.f32 %v2055, %v2146
  %2148 = vmatmul.f32.gmra.mxu0 %v919
  %v2149 = vpop.f32.mrf.mxu0
  %v2150 = vadd.f32 %v2058, %v2149
  %2151 = vmatmul.f32.gmra.mxu0 %v922
  %v2152 = vpop.f32.mrf.mxu0
  %v2153 = vadd.f32 %v2061, %v2152
  %2154 = vmatmul.f32.gmra.mxu0 %v925
  %v2155 = vpop.f32.mrf.mxu0
  %v2156 = vadd.f32 %v2064, %v2155
  %2157 = vmatmul.f32.gmra.mxu0 %v928
  %v2158 = vpop.f32.mrf.mxu0
  %v2159 = vadd.f32 %v2067, %v2158
  %2160 = vmatmul.f32.gmra.mxu0 %v931
  %v2161 = vpop.f32.mrf.mxu0
  %v2162 = vadd.f32 %v2070, %v2161
  %2163 = vmatmul.f32.gmra.mxu0 %v934
  %v2164 = vpop.f32.mrf.mxu0
  %v2165 = vadd.f32 %v2073, %v2164
  %2166 = vmatmul.f32.gmra.mxu0 %v937
  %v2167 = vpop.f32.mrf.mxu0
  %v2168 = vadd.f32 %v2076, %v2167
  %2169 = vmatmul.f32.gmra.mxu0 %v940
  %v2170 = vpop.f32.mrf.mxu0
  %v2171 = vadd.f32 %v2079, %v2170
  %2172 = vmatmul.f32.gmra.mxu0 %v943
  %v2173 = vpop.f32.mrf.mxu0
  %v2174 = vadd.f32 %v2082, %v2173
  %2175 = vmatmul.f32.gmra.mxu0 %v946
  %v2176 = vpop.f32.mrf.mxu0
  %v2177 = vadd.f32 %v2085, %v2176
  %2178 = vmatmul.f32.gmra.mxu0 %v949
  %v2179 = vpop.f32.mrf.mxu0
  %v2180 = vadd.f32 %v2088, %v2179
  %2181 = vmatmul.f32.gmra.mxu0 %v952
  %v2182 = vpop.f32.mrf.mxu0
  %v2183 = vadd.f32 %v2091, %v2182
  %2184 = vmatmul.f32.gmra.mxu0 %v955
  %v2185 = vpop.f32.mrf.mxu0
  %v2186 = vadd.f32 %v2094, %v2185
  %2187 = vmatmul.f32.gmra.mxu0 %v958
  %v2188 = vpop.f32.mrf.mxu0
  %v2189 = vadd.f32 %v2097, %v2188
  %2190 = vmatmul.f32.gmra.mxu0 %v961
  %v2191 = vpop.f32.mrf.mxu0
  %v2192 = vadd.f32 %v2100, %v2191
  %2193 = vmatmul.f32.gmra.mxu0 %v964
  %v2194 = vpop.f32.mrf.mxu0
  %v2195 = vadd.f32 %v2103, %v2194
  %2196 = vmatmul.f32.gmra.mxu0 %v967
  %v2197 = vpop.f32.mrf.mxu0
  %v2198 = vadd.f32 %v2106, %v2197
  %2199 = vdwg.mxu0
  %2200 = vmatpush.msra.mxu0 %v1991
  %2201 = vmatpush.msra.mxu0 %v1989
  %2202 = vmatpush.msra.mxu0 %v1931
  %2203 = vmatpush.msra.mxu0 %v1929
  %2204 = vmatpush.msra.mxu0 %v1927
  %2205 = vmatpush.msra.mxu0 %v1925
  %2206 = vmatpush.msra.mxu0 %v1923
  %2207 = vmatpush.msra.mxu0 %v1921
  %2208 = vmatpush.msra.mxu0 %v1919
  %2209 = vmatpush.msra.mxu0 %v1917
  %2210 = vmatpush.msra.mxu0 %v1915
  %2211 = vmatpush.msra.mxu0 %v1913
  %2212 = vmatpush.msra.mxu0 %v1911
  %2213 = vmatpush.msra.mxu0 %v1909
  %2214 = vmatpush.msra.mxu0 %v1907
  %2215 = vmatpush.msra.mxu0 %v1905
  %2216 = vmatmul.f32.gmra.mxu0 %v73
  %v2217 = vpop.f32.mrf.mxu0
  %v2218 = vadd.f32 0.0, %v2217
  %2219 = vmatmul.f32.gmra.mxu0 %v75
  %v2220 = vpop.f32.mrf.mxu0
  %v2221 = vadd.f32 0.0, %v2220
  %2222 = vmatmul.f32.gmra.mxu0 %v77
  %v2223 = vpop.f32.mrf.mxu0
  %v2224 = vadd.f32 0.0, %v2223
  %2225 = vmatmul.f32.gmra.mxu0 %v79
  %v2226 = vpop.f32.mrf.mxu0
  %v2227 = vadd.f32 0.0, %v2226
  %2228 = vmatmul.f32.gmra.mxu0 %v81
  %v2229 = vpop.f32.mrf.mxu0
  %v2230 = vadd.f32 0.0, %v2229
  %2231 = vmatmul.f32.gmra.mxu0 %v83
  %v2232 = vpop.f32.mrf.mxu0
  %v2233 = vadd.f32 0.0, %v2232
  %2234 = vmatmul.f32.gmra.mxu0 %v85
  %v2235 = vpop.f32.mrf.mxu0
  %v2236 = vadd.f32 0.0, %v2235
  %2237 = vmatmul.f32.gmra.mxu0 %v87
  %v2238 = vpop.f32.mrf.mxu0
  %v2239 = vadd.f32 0.0, %v2238
  %2240 = vmatmul.f32.gmra.mxu0 %v89
  %v2241 = vpop.f32.mrf.mxu0
  %v2242 = vadd.f32 0.0, %v2241
  %2243 = vmatmul.f32.gmra.mxu0 %v91
  %v2244 = vpop.f32.mrf.mxu0
  %v2245 = vadd.f32 0.0, %v2244
  %2246 = vmatmul.f32.gmra.mxu0 %v93
  %v2247 = vpop.f32.mrf.mxu0
  %v2248 = vadd.f32 0.0, %v2247
  %2249 = vmatmul.f32.gmra.mxu0 %v95
  %v2250 = vpop.f32.mrf.mxu0
  %v2251 = vadd.f32 0.0, %v2250
  %2252 = vmatmul.f32.gmra.mxu0 %v97
  %v2253 = vpop.f32.mrf.mxu0
  %v2254 = vadd.f32 0.0, %v2253
  %2255 = vmatmul.f32.gmra.mxu0 %v99
  %v2256 = vpop.f32.mrf.mxu0
  %v2257 = vadd.f32 0.0, %v2256
  %2258 = vmatmul.f32.gmra.mxu0 %v101
  %v2259 = vpop.f32.mrf.mxu0
  %v2260 = vadd.f32 0.0, %v2259
  %2261 = vmatmul.f32.gmra.mxu0 %v103
  %v2262 = vpop.f32.mrf.mxu0
  %v2263 = vadd.f32 0.0, %v2262
  %2264 = vmatmul.f32.gmra.mxu0 %v105
  %v2265 = vpop.f32.mrf.mxu0
  %v2266 = vadd.f32 0.0, %v2265
  %2267 = vmatmul.f32.gmra.mxu0 %v107
  %v2268 = vpop.f32.mrf.mxu0
  %v2269 = vadd.f32 0.0, %v2268
  %2270 = vmatmul.f32.gmra.mxu0 %v109
  %v2271 = vpop.f32.mrf.mxu0
  %v2272 = vadd.f32 0.0, %v2271
  %2273 = vmatmul.f32.gmra.mxu0 %v111
  %v2274 = vpop.f32.mrf.mxu0
  %v2275 = vadd.f32 0.0, %v2274
  %2276 = vmatmul.f32.gmra.mxu0 %v113
  %v2277 = vpop.f32.mrf.mxu0
  %v2278 = vadd.f32 0.0, %v2277
  %2279 = vmatmul.f32.gmra.mxu0 %v115
  %v2280 = vpop.f32.mrf.mxu0
  %v2281 = vadd.f32 0.0, %v2280
  %2282 = vmatmul.f32.gmra.mxu0 %v117
  %v2283 = vpop.f32.mrf.mxu0
  %v2284 = vadd.f32 0.0, %v2283
  %2285 = vmatmul.f32.gmra.mxu0 %v119
  %v2286 = vpop.f32.mrf.mxu0
  %v2287 = vadd.f32 0.0, %v2286
  %2288 = vmatmul.f32.gmra.mxu0 %v121
  %v2289 = vpop.f32.mrf.mxu0
  %v2290 = vadd.f32 0.0, %v2289
  %2291 = vdwg.mxu0
  %2292 = vmatpush.msra.mxu0 0.0
  %2293 = vmatpush.msra.mxu0 0.0
  %2294 = vmatpush.msra.mxu0 0.0
  %2295 = vmatpush.msra.mxu0 0.0
  %2296 = vmatpush.msra.mxu0 %v2015
  %2297 = vmatpush.msra.mxu0 %v2013
  %2298 = vmatpush.msra.mxu0 %v2011
  %2299 = vmatpush.msra.mxu0 %v2009
  %2300 = vmatpush.msra.mxu0 %v2007
  %2301 = vmatpush.msra.mxu0 %v2005
  %2302 = vmatpush.msra.mxu0 %v2003
  %2303 = vmatpush.msra.mxu0 %v2001
  %2304 = vmatpush.msra.mxu0 %v1999
  %2305 = vmatpush.msra.mxu0 %v1997
  %2306 = vmatpush.msra.mxu0 %v1995
  %2307 = vmatpush.msra.mxu0 %v1993
  %2308 = vmatmul.f32.gmra.mxu0 %v895
  %v2309 = vpop.f32.mrf.mxu0
  %v2310 = vadd.f32 %v2218, %v2309
  %2311 = vmatmul.f32.gmra.mxu0 %v898
  %v2312 = vpop.f32.mrf.mxu0
  %v2313 = vadd.f32 %v2221, %v2312
  %2314 = vmatmul.f32.gmra.mxu0 %v901
  %v2315 = vpop.f32.mrf.mxu0
  %v2316 = vadd.f32 %v2224, %v2315
  %2317 = vmatmul.f32.gmra.mxu0 %v904
  %v2318 = vpop.f32.mrf.mxu0
  %v2319 = vadd.f32 %v2227, %v2318
  %2320 = vmatmul.f32.gmra.mxu0 %v907
  %v2321 = vpop.f32.mrf.mxu0
  %v2322 = vadd.f32 %v2230, %v2321
  %2323 = vmatmul.f32.gmra.mxu0 %v910
  %v2324 = vpop.f32.mrf.mxu0
  %v2325 = vadd.f32 %v2233, %v2324
  %2326 = vmatmul.f32.gmra.mxu0 %v913
  %v2327 = vpop.f32.mrf.mxu0
  %v2328 = vadd.f32 %v2236, %v2327
  %2329 = vmatmul.f32.gmra.mxu0 %v916
  %v2330 = vpop.f32.mrf.mxu0
  %v2331 = vadd.f32 %v2239, %v2330
  %2332 = vmatmul.f32.gmra.mxu0 %v919
  %v2333 = vpop.f32.mrf.mxu0
  %v2334 = vadd.f32 %v2242, %v2333
  %2335 = vmatmul.f32.gmra.mxu0 %v922
  %v2336 = vpop.f32.mrf.mxu0
  %v2337 = vadd.f32 %v2245, %v2336
  %2338 = vmatmul.f32.gmra.mxu0 %v925
  %v2339 = vpop.f32.mrf.mxu0
  %v2340 = vadd.f32 %v2248, %v2339
  %2341 = vmatmul.f32.gmra.mxu0 %v928
  %v2342 = vpop.f32.mrf.mxu0
  %v2343 = vadd.f32 %v2251, %v2342
  %2344 = vmatmul.f32.gmra.mxu0 %v931
  %v2345 = vpop.f32.mrf.mxu0
  %v2346 = vadd.f32 %v2254, %v2345
  %2347 = vmatmul.f32.gmra.mxu0 %v934
  %v2348 = vpop.f32.mrf.mxu0
  %v2349 = vadd.f32 %v2257, %v2348
  %2350 = vmatmul.f32.gmra.mxu0 %v937
  %v2351 = vpop.f32.mrf.mxu0
  %v2352 = vadd.f32 %v2260, %v2351
  %2353 = vmatmul.f32.gmra.mxu0 %v940
  %v2354 = vpop.f32.mrf.mxu0
  %v2355 = vadd.f32 %v2263, %v2354
  %2356 = vmatmul.f32.gmra.mxu0 %v943
  %v2357 = vpop.f32.mrf.mxu0
  %v2358 = vadd.f32 %v2266, %v2357
  %2359 = vmatmul.f32.gmra.mxu0 %v946
  %v2360 = vpop.f32.mrf.mxu0
  %v2361 = vadd.f32 %v2269, %v2360
  %2362 = vmatmul.f32.gmra.mxu0 %v949
  %v2363 = vpop.f32.mrf.mxu0
  %v2364 = vadd.f32 %v2272, %v2363
  %2365 = vmatmul.f32.gmra.mxu0 %v952
  %v2366 = vpop.f32.mrf.mxu0
  %v2367 = vadd.f32 %v2275, %v2366
  %2368 = vmatmul.f32.gmra.mxu0 %v955
  %v2369 = vpop.f32.mrf.mxu0
  %v2370 = vadd.f32 %v2278, %v2369
  %2371 = vmatmul.f32.gmra.mxu0 %v958
  %v2372 = vpop.f32.mrf.mxu0
  %v2373 = vadd.f32 %v2281, %v2372
  %2374 = vmatmul.f32.gmra.mxu0 %v961
  %v2375 = vpop.f32.mrf.mxu0
  %v2376 = vadd.f32 %v2284, %v2375
  %2377 = vmatmul.f32.gmra.mxu0 %v964
  %v2378 = vpop.f32.mrf.mxu0
  %v2379 = vadd.f32 %v2287, %v2378
  %2380 = vmatmul.f32.gmra.mxu0 %v967
  %v2381 = vpop.f32.mrf.mxu0
  %v2382 = vadd.f32 %v2290, %v2381
  %2383 = vdwg.mxu0
  %s2384 = scalar_lea.vmem %s4, 400
  %2385 = vst [vmem:[%s2384] sm:$0xff] %v2126
  %2386 = vst [vmem:[%s2384 + $0x8] sm:$0xff] %v2310
  %2387 = vst [vmem:[%s2384 + $0x10] sm:$0xff] %v2129
  %2388 = vst [vmem:[%s2384 + $0x18] sm:$0xff] %v2313
  %2389 = vst [vmem:[%s2384 + $0x20] sm:$0xff] %v2132
  %2390 = vst [vmem:[%s2384 + $0x28] sm:$0xff] %v2316
  %2391 = vst [vmem:[%s2384 + $0x30] sm:$0xff] %v2135
  %2392 = vst [vmem:[%s2384 + $0x38] sm:$0xff] %v2319
  %2393 = vst [vmem:[%s2384 + $0x40] sm:$0xff] %v2138
  %2394 = vst [vmem:[%s2384 + $0x48] sm:$0xff] %v2322
  %2395 = vst [vmem:[%s2384 + $0x50] sm:$0xff] %v2141
  %2396 = vst [vmem:[%s2384 + $0x58] sm:$0xff] %v2325
  %2397 = vst [vmem:[%s2384 + $0x60] sm:$0xff] %v2144
  %2398 = vst [vmem:[%s2384 + $0x68] sm:$0xff] %v2328
  %2399 = vst [vmem:[%s2384 + $0x70] sm:$0xff] %v2147
  %2400 = vst [vmem:[%s2384 + $0x78] sm:$0xff] %v2331
  %2401 = vst [vmem:[%s2384 + $0x80] sm:$0xff] %v2150
  %2402 = vst [vmem:[%s2384 + $0x88] sm:$0xff] %v2334
  %2403 = vst [vmem:[%s2384 + $0x90] sm:$0xff] %v2153
  %2404 = vst [vmem:[%s2384 + $0x98] sm:$0xff] %v2337
  %2405 = vst [vmem:[%s2384 + $0xa0] sm:$0xff] %v2156
  %2406 = vst [vmem:[%s2384 + $0xa8] sm:$0xff] %v2340
  %2407 = vst [vmem:[%s2384 + $0xb0] sm:$0xff] %v2159
  %2408 = vst [vmem:[%s2384 + $0xb8] sm:$0xff] %v2343
  %2409 = vst [vmem:[%s2384 + $0xc0] sm:$0xff] %v2162
  %2410 = vst [vmem:[%s2384 + $0xc8] sm:$0xff] %v2346
  %2411 = vst [vmem:[%s2384 + $0xd0] sm:$0xff] %v2165
  %2412 = vst [vmem:[%s2384 + $0xd8] sm:$0xff] %v2349
  %2413 = vst [vmem:[%s2384 + $0xe0] sm:$0xff] %v2168
  %2414 = vst [vmem:[%s2384 + $0xe8] sm:$0xff] %v2352
  %2415 = vst [vmem:[%s2384 + $0xf0] sm:$0xff] %v2171
  %2416 = vst [vmem:[%s2384 + $0xf8] sm:$0xff] %v2355
  %2417 = vst [vmem:[%s2384 + $0x100] sm:$0xff] %v2174
  %2418 = vst [vmem:[%s2384 + $0x108] sm:$0xff] %v2358
  %2419 = vst [vmem:[%s2384 + $0x110] sm:$0xff] %v2177
  %2420 = vst [vmem:[%s2384 + $0x118] sm:$0xff] %v2361
  %2421 = vst [vmem:[%s2384 + $0x120] sm:$0xff] %v2180
  %2422 = vst [vmem:[%s2384 + $0x128] sm:$0xff] %v2364
  %2423 = vst [vmem:[%s2384 + $0x130] sm:$0xff] %v2183
  %2424 = vst [vmem:[%s2384 + $0x138] sm:$0xff] %v2367
  %2425 = vst [vmem:[%s2384 + $0x140] sm:$0xff] %v2186
  %2426 = vst [vmem:[%s2384 + $0x148] sm:$0xff] %v2370
  %2427 = vst [vmem:[%s2384 + $0x150] sm:$0xff] %v2189
  %2428 = vst [vmem:[%s2384 + $0x158] sm:$0xff] %v2373
  %2429 = vst [vmem:[%s2384 + $0x160] sm:$0xff] %v2192
  %2430 = vst [vmem:[%s2384 + $0x168] sm:$0xff] %v2376
  %2431 = vst [vmem:[%s2384 + $0x170] sm:$0xff] %v2195
  %2432 = vst [vmem:[%s2384 + $0x178] sm:$0xff] %v2379
  %2433 = vst [vmem:[%s2384 + $0x180] sm:$0xf] %v2198
  %2434 = vst [vmem:[%s2384 + $0x188] sm:$0xf] %v2382
  // Predicated region
  $region18: #{tpu_custom_call.1} parent=0 // pred_check
    _
  $region19: #{tpu_custom_call.1} parent=0 // pred_check_branch
    %2436 = sbr.rel (0) target = $region21
  $region20: #{tpu_custom_call.1} parent=0 // pred_region
    _
  $region21: #{tpu_custom_call.1} parent=0 // pred_fallthru
    _
  // Predicated region
  $region22: #{tpu_custom_call.1} parent=0 // pred_check
    _
  $region23: #{tpu_custom_call.1} parent=0 // pred_check_branch
    %2438 = sbr.rel (0) target = $region25
  $region24: #{tpu_custom_call.1} parent=0 // pred_region
    _
  $region25: #{tpu_custom_call.1} parent=0 // pred_fallthru
    _

</llo_original>
